<compile_context>
chip_gen: v7x
topology: tpu7x:2x2x1
jax: 0.10.0
libtpu: 0.0.40
codegen_flags: <defaults>
</compile_context>

<pallas_src>
import jax
import jax.numpy as jnp
from jax import lax
from jax.experimental import pallas as pl
from jax.experimental.pallas import tpu as pltpu

# ----------------------------- model config ---------------------------------
NUM_PROBS = 16   # vocabulary size / number of output probabilities
EMB_DIM   = 16
H_DIM     = 32
NUM_RNN   = 2
DROPOUT   = 0.1  # eval mode -> identity
B         = 2
T         = 8


def _make_kernel(num_layers: int, seq_len: int, batch: int, num_probs: int):
    """Builds a Pallas kernel closed over static layer/seq/batch counts."""

    def kernel(tok_ref, *refs):
        # refs layout: [(w_in_0, b_0, w_hh_0), ..., (w_in_{L-1}, b_{L-1}, w_hh_{L-1}),
        #               w1, b1, w2, b2, out_ref]
        # w_in_0 is the fused (P, 4H) = embedding @ W_ih0^T table; later layers
        # get plain (H, 4H) input-projection weights.
        layer_refs = refs[: 3 * num_layers]
        w1_ref, b1_ref, w2_ref, b2_ref, out_ref = refs[3 * num_layers:]

        rows = seq_len * batch
        tok = tok_ref[...]                                        # (T*B, 1) int32, time-major
        iota_p = lax.broadcasted_iota(jnp.int32, (rows, num_probs), 1)
        one_hot = (tok == iota_p).astype(jnp.float32)             # (T*B, P)

        # Layer-0 "input" slab; the embedding lookup is folded into w_in_0.
        x_slab = one_hot

        h = None
        for l in range(num_layers):
            w_in = layer_refs[3 * l][...]                         # (P,4H) l==0 else (H,4H)
            b    = layer_refs[3 * l + 1][...]                     # (1, 4H)
            w_hh = layer_refs[3 * l + 2][...]                     # (H, 4H)
            hdim = w_hh.shape[0]

            # Hoisted input projection: one matmul + one bias add for all T steps.
            xw = jnp.dot(x_slab, w_in, preferred_element_type=jnp.float32) + b   # (T*B, 4H)

            h = jnp.zeros((batch, hdim), jnp.float32)
            c = jnp.zeros((batch, hdim), jnp.float32)
            last_layer = (l == num_layers - 1)
            outs = []
            for t in range(seq_len):
                gates = xw[t * batch:(t + 1) * batch, :] + jnp.dot(
                    h, w_hh, preferred_element_type=jnp.float32)          # (B, 4H)
                # Two full-vreg transcendentals instead of four 32-lane ones.
                sig = jax.nn.sigmoid(gates)
                tnh = jnp.tanh(gates)
                i_g = sig[:, 0 * hdim:1 * hdim]
                f_g = sig[:, 1 * hdim:2 * hdim]
                g_g = tnh[:, 2 * hdim:3 * hdim]
                o_g = sig[:, 3 * hdim:4 * hdim]
                c = f_g * c + i_g * g_g
                h = o_g * jnp.tanh(c)
                if not last_layer:
                    outs.append(h)
            if not last_layer:
                # Stack to a time-major slab feeding the next layer's hoisted
                # input projection; last layer carries only (h, c).
                x_slab = jnp.concatenate(outs, axis=0)            # (T*B, H)
            # TODO(synk): PyTorch applies inter-layer dropout in training mode
            # only; eval forward is identity, so omitted.

        last = h                                                  # (B, H) last step, top layer
        hid = jnp.dot(last, w1_ref[...], preferred_element_type=jnp.float32) + b1_ref[...]
        hid = jnp.maximum(hid, 0.0)                               # ReLU; drop1 identity in eval
        logits = jnp.dot(hid, w2_ref[...], preferred_element_type=jnp.float32) + b2_ref[...]
        out_ref[...] = logits.astype(out_ref.dtype)

    return kernel


def seq_to_prob_forward(tokens, params):
    """Pallas-backed forward pass. tokens: (B, T) int32."""
    emb = params["embedding"]                                     # (P, E)

    layer_args = []
    for l in range(NUM_RNN):
        w_ih, w_hh, b_ih, b_hh = params["lstm"][l]
        w_in = w_ih.T                                             # (in, 4H)
        if l == 0:
            # Fuse embedding into the layer-0 input projection (trace-time
            # weight math): one_hot @ (emb @ W_ih0^T) == (one_hot @ emb) @ W_ih0^T.
            w_in = jnp.dot(emb, w_in, precision=lax.Precision.HIGHEST)    # (P, 4H)
        layer_args += [w_in, (b_ih + b_hh)[None, :], w_hh.T]      # (in,4H), (1,4H), (H,4H)

    w1, b1 = params["fc1"]
    w2, b2 = params["fc2"]
    fc_args = [w1.T, b1[None, :], w2.T, b2[None, :]]

    bsz, seq_len = tokens.shape
    # Time-major flattened tokens: row t*B + b holds tokens[b, t].
    tok_tb = tokens.T.reshape(seq_len * bsz, 1).astype(jnp.int32)

    args = [tok_tb] + layer_args + fc_args
    n_in = len(args)

    vmem_spec = pl.BlockSpec(memory_space=pltpu.MemorySpace.VMEM)
    kernel = _make_kernel(NUM_RNN, seq_len, bsz, NUM_PROBS)

    # Gridless single program: total VMEM footprint is a few KiB, so no
    # tiling / pipelining / vmem_limit tweaks are warranted at this size.
    return pl.pallas_call(
        kernel,
        out_shape=jax.ShapeDtypeStruct((bsz, NUM_PROBS), jnp.float32),
        in_specs=[vmem_spec] * n_in,
        out_specs=vmem_spec,
    )(*args)


# ----------------------------- reference (pure JAX) -------------------------
def seq_to_prob_reference(tokens, params):
    x = jnp.take(params["embedding"], tokens, axis=0)             # (B, T, E)
    for l in range(NUM_RNN):
        w_ih, w_hh, b_ih, b_hh = params["lstm"][l]
        hdim = w_hh.shape[1]
        h = jnp.zeros((x.shape[0], hdim), jnp.float32)
        c = jnp.zeros((x.shape[0], hdim), jnp.float32)
        outs = []
        for t in range(x.shape[1]):
            gates = x[:, t, :] @ w_ih.T + b_ih + h @ w_hh.T + b_hh
            i_g = jax.nn.sigmoid(gates[:, 0 * hdim:1 * hdim])
            f_g = jax.nn.sigmoid(gates[:, 1 * hdim:2 * hdim])
            g_g = jnp.tanh(gates[:, 2 * hdim:3 * hdim])
            o_g = jax.nn.sigmoid(gates[:, 3 * hdim:4 * hdim])
            c = f_g * c + i_g * g_g
            h = o_g * jnp.tanh(c)
            outs.append(h)
        x = jnp.stack(outs, axis=1)
    w1, b1 = params["fc1"]
    w2, b2 = params["fc2"]
    hid = jnp.maximum(x[:, -1, :] @ w1.T + b1, 0.0)
    return hid @ w2.T + b2


# ----------------------------- parameter init -------------------------------
def init_params(key):
    keys = jax.random.split(key, 4 + 4 * NUM_RNN)
    params = {}
    params["embedding"] = 0.1 * jax.random.normal(keys[0], (NUM_PROBS, EMB_DIM), jnp.float32)
    lstm = []
    for l in range(NUM_RNN):
        in_dim = EMB_DIM if l == 0 else H_DIM
        k = keys[1 + 4 * l: 1 + 4 * (l + 1)]
        w_ih = 0.1 * jax.random.normal(k[0], (4 * H_DIM, in_dim), jnp.float32)
        w_hh = 0.1 * jax.random.normal(k[1], (4 * H_DIM, H_DIM), jnp.float32)
        b_ih = 0.1 * jax.random.normal(k[2], (4 * H_DIM,), jnp.float32)
        b_hh = 0.1 * jax.random.normal(k[3], (4 * H_DIM,), jnp.float32)
        lstm.append((w_ih, w_hh, b_ih, b_hh))
    params["lstm"] = lstm
    k1, k2, k3 = keys[1 + 4 * NUM_RNN: 4 + 4 * NUM_RNN]
    params["fc1"] = (0.1 * jax.random.normal(k1, (H_DIM, H_DIM), jnp.float32),
                     0.1 * jax.random.normal(k2, (H_DIM,), jnp.float32))
    params["fc2"] = (0.1 * jax.random.normal(k3, (NUM_PROBS, H_DIM), jnp.float32),
                     jnp.zeros((NUM_PROBS,), jnp.float32))
    return params


if __name__ == "__main__":
    key = jax.random.PRNGKey(0)
    pkey, tkey = jax.random.split(key)
    params = init_params(pkey)
    tokens = jax.random.randint(tkey, (B, T), 0, NUM_PROBS, dtype=jnp.int32)

    logits = seq_to_prob_forward(tokens, params)
    logits = jax.block_until_ready(logits)

    ref = seq_to_prob_reference(tokens, params)
    assert logits.shape == (B, NUM_PROBS), logits.shape
    assert jnp.allclose(logits, ref, atol=1e-4, rtol=1e-4), (logits, ref)

    print("KERNEL_OK")
</pallas_src>

<mosaic_0001>
module attributes {stable_mosaic.version = 11 : i64} {
  func.func @kernel(%arg0: memref<16x1xi32, #tpu.memory_space<vmem>>, %arg1: memref<16x128xf32, #tpu.memory_space<vmem>>, %arg2: memref<1x128xf32, #tpu.memory_space<vmem>>, %arg3: memref<32x128xf32, #tpu.memory_space<vmem>>, %arg4: memref<32x128xf32, #tpu.memory_space<vmem>>, %arg5: memref<1x128xf32, #tpu.memory_space<vmem>>, %arg6: memref<32x128xf32, #tpu.memory_space<vmem>>, %arg7: memref<32x32xf32, #tpu.memory_space<vmem>>, %arg8: memref<1x32xf32, #tpu.memory_space<vmem>>, %arg9: memref<32x16xf32, #tpu.memory_space<vmem>>, %arg10: memref<1x16xf32, #tpu.memory_space<vmem>>, %arg11: memref<2x16xf32, #tpu.memory_space<vmem>>) attributes {dimension_semantics = [], scalar_prefetch = 0 : i64, scratch_operands = 0 : i64, tpu.core_type = #tpu.core_type<tc>} {
    %c0 = arith.constant 0 : index
    %c0_0 = arith.constant 0 : index
    %0 = vector.load %arg0[%c0, %c0_0] : memref<16x1xi32, #tpu.memory_space<vmem>>, vector<16x1xi32>
    %1 = tpu.iota {dimensions = array<i32: 1>} : vector<16x16xi32>
    %2 = vector.broadcast %0 : vector<16x1xi32> to vector<16x16xi32>
    %3 = arith.cmpi eq, %2, %1 : vector<16x16xi32>
    %4 = arith.extui %3 : vector<16x16xi1> to vector<16x16xi32>
    %5 = arith.sitofp %4 : vector<16x16xi32> to vector<16x16xf32>
    %c0_1 = arith.constant 0 : index
    %c0_2 = arith.constant 0 : index
    %6 = vector.load %arg1[%c0_1, %c0_2] : memref<16x128xf32, #tpu.memory_space<vmem>>, vector<16x128xf32>
    %c0_3 = arith.constant 0 : index
    %c0_4 = arith.constant 0 : index
    %7 = vector.load %arg2[%c0_3, %c0_4] : memref<1x128xf32, #tpu.memory_space<vmem>>, vector<1x128xf32>
    %c0_5 = arith.constant 0 : index
    %c0_6 = arith.constant 0 : index
    %8 = vector.load %arg3[%c0_5, %c0_6] : memref<32x128xf32, #tpu.memory_space<vmem>>, vector<32x128xf32>
    %cst = arith.constant dense<0.000000e+00> : vector<16x128xf32>
    %9 = tpu.matmul %5, %6, %cst {dimension_numbers = #tpu.dot_dimension_numbers<[1], [0], [0], [1], [0, 0, 1, 1], [], []>} : vector<16x16xf32>, vector<16x128xf32>, vector<16x128xf32> -> vector<16x128xf32>
    %10 = vector.broadcast %7 : vector<1x128xf32> to vector<16x128xf32>
    %11 = arith.addf %9, %10 : vector<16x128xf32>
    %cst_7 = arith.constant 0.000000e+00 : f32
    %12 = vector.broadcast %cst_7 : f32 to vector<2x32xf32>
    %cst_8 = arith.constant 0.000000e+00 : f32
    %13 = vector.broadcast %cst_8 : f32 to vector<2x32xf32>
    %14 = vector.extract_strided_slice %11 {offsets = [0, 0], sizes = [2, 128], strides = [1, 1]} : vector<16x128xf32> to vector<2x128xf32>
    %cst_9 = arith.constant dense<0.000000e+00> : vector<2x128xf32>
    %15 = tpu.matmul %12, %8, %cst_9 {dimension_numbers = #tpu.dot_dimension_numbers<[1], [0], [0], [1], [0, 0, 1, 1], [], []>} : vector<2x32xf32>, vector<32x128xf32>, vector<2x128xf32> -> vector<2x128xf32>
    %16 = arith.addf %14, %15 : vector<2x128xf32>
    %17 = arith.negf %16 : vector<2x128xf32>
    %18 = math.exp %17 : vector<2x128xf32>
    %cst_10 = arith.constant 1.000000e+00 : f32
    %19 = vector.broadcast %cst_10 : f32 to vector<2x128xf32>
    %20 = arith.addf %19, %18 : vector<2x128xf32>
    %21 = arith.divf %19, %20 : vector<2x128xf32>
    %22 = math.tanh %16 : vector<2x128xf32>
    %23 = vector.extract_strided_slice %21 {offsets = [0, 0], sizes = [2, 32], strides = [1, 1]} : vector<2x128xf32> to vector<2x32xf32>
    %24 = vector.extract_strided_slice %21 {offsets = [0, 32], sizes = [2, 32], strides = [1, 1]} : vector<2x128xf32> to vector<2x32xf32>
    %25 = vector.extract_strided_slice %22 {offsets = [0, 64], sizes = [2, 32], strides = [1, 1]} : vector<2x128xf32> to vector<2x32xf32>
    %26 = vector.extract_strided_slice %21 {offsets = [0, 96], sizes = [2, 32], strides = [1, 1]} : vector<2x128xf32> to vector<2x32xf32>
    %27 = arith.mulf %24, %13 : vector<2x32xf32>
    %28 = arith.mulf %23, %25 : vector<2x32xf32>
    %29 = arith.addf %27, %28 : vector<2x32xf32>
    %30 = math.tanh %29 : vector<2x32xf32>
    %31 = arith.mulf %26, %30 : vector<2x32xf32>
    %32 = vector.extract_strided_slice %11 {offsets = [2, 0], sizes = [2, 128], strides = [1, 1]} : vector<16x128xf32> to vector<2x128xf32>
    %cst_11 = arith.constant dense<0.000000e+00> : vector<2x128xf32>
    %33 = tpu.matmul %31, %8, %cst_11 {dimension_numbers = #tpu.dot_dimension_numbers<[1], [0], [0], [1], [0, 0, 1, 1], [], []>} : vector<2x32xf32>, vector<32x128xf32>, vector<2x128xf32> -> vector<2x128xf32>
    %34 = arith.addf %32, %33 : vector<2x128xf32>
    %35 = arith.negf %34 : vector<2x128xf32>
    %36 = math.exp %35 : vector<2x128xf32>
    %cst_12 = arith.constant 1.000000e+00 : f32
    %37 = vector.broadcast %cst_12 : f32 to vector<2x128xf32>
    %38 = arith.addf %37, %36 : vector<2x128xf32>
    %39 = arith.divf %37, %38 : vector<2x128xf32>
    %40 = math.tanh %34 : vector<2x128xf32>
    %41 = vector.extract_strided_slice %39 {offsets = [0, 0], sizes = [2, 32], strides = [1, 1]} : vector<2x128xf32> to vector<2x32xf32>
    %42 = vector.extract_strided_slice %39 {offsets = [0, 32], sizes = [2, 32], strides = [1, 1]} : vector<2x128xf32> to vector<2x32xf32>
    %43 = vector.extract_strided_slice %40 {offsets = [0, 64], sizes = [2, 32], strides = [1, 1]} : vector<2x128xf32> to vector<2x32xf32>
    %44 = vector.extract_strided_slice %39 {offsets = [0, 96], sizes = [2, 32], strides = [1, 1]} : vector<2x128xf32> to vector<2x32xf32>
    %45 = arith.mulf %42, %29 : vector<2x32xf32>
    %46 = arith.mulf %41, %43 : vector<2x32xf32>
    %47 = arith.addf %45, %46 : vector<2x32xf32>
    %48 = math.tanh %47 : vector<2x32xf32>
    %49 = arith.mulf %44, %48 : vector<2x32xf32>
    %50 = vector.extract_strided_slice %11 {offsets = [4, 0], sizes = [2, 128], strides = [1, 1]} : vector<16x128xf32> to vector<2x128xf32>
    %cst_13 = arith.constant dense<0.000000e+00> : vector<2x128xf32>
    %51 = tpu.matmul %49, %8, %cst_13 {dimension_numbers = #tpu.dot_dimension_numbers<[1], [0], [0], [1], [0, 0, 1, 1], [], []>} : vector<2x32xf32>, vector<32x128xf32>, vector<2x128xf32> -> vector<2x128xf32>
    %52 = arith.addf %50, %51 : vector<2x128xf32>
    %53 = arith.negf %52 : vector<2x128xf32>
    %54 = math.exp %53 : vector<2x128xf32>
    %cst_14 = arith.constant 1.000000e+00 : f32
    %55 = vector.broadcast %cst_14 : f32 to vector<2x128xf32>
    %56 = arith.addf %55, %54 : vector<2x128xf32>
    %57 = arith.divf %55, %56 : vector<2x128xf32>
    %58 = math.tanh %52 : vector<2x128xf32>
    %59 = vector.extract_strided_slice %57 {offsets = [0, 0], sizes = [2, 32], strides = [1, 1]} : vector<2x128xf32> to vector<2x32xf32>
    %60 = vector.extract_strided_slice %57 {offsets = [0, 32], sizes = [2, 32], strides = [1, 1]} : vector<2x128xf32> to vector<2x32xf32>
    %61 = vector.extract_strided_slice %58 {offsets = [0, 64], sizes = [2, 32], strides = [1, 1]} : vector<2x128xf32> to vector<2x32xf32>
    %62 = vector.extract_strided_slice %57 {offsets = [0, 96], sizes = [2, 32], strides = [1, 1]} : vector<2x128xf32> to vector<2x32xf32>
    %63 = arith.mulf %60, %47 : vector<2x32xf32>
    %64 = arith.mulf %59, %61 : vector<2x32xf32>
    %65 = arith.addf %63, %64 : vector<2x32xf32>
    %66 = math.tanh %65 : vector<2x32xf32>
    %67 = arith.mulf %62, %66 : vector<2x32xf32>
    %68 = vector.extract_strided_slice %11 {offsets = [6, 0], sizes = [2, 128], strides = [1, 1]} : vector<16x128xf32> to vector<2x128xf32>
    %cst_15 = arith.constant dense<0.000000e+00> : vector<2x128xf32>
    %69 = tpu.matmul %67, %8, %cst_15 {dimension_numbers = #tpu.dot_dimension_numbers<[1], [0], [0], [1], [0, 0, 1, 1], [], []>} : vector<2x32xf32>, vector<32x128xf32>, vector<2x128xf32> -> vector<2x128xf32>
    %70 = arith.addf %68, %69 : vector<2x128xf32>
    %71 = arith.negf %70 : vector<2x128xf32>
    %72 = math.exp %71 : vector<2x128xf32>
    %cst_16 = arith.constant 1.000000e+00 : f32
    %73 = vector.broadcast %cst_16 : f32 to vector<2x128xf32>
    %74 = arith.addf %73, %72 : vector<2x128xf32>
    %75 = arith.divf %73, %74 : vector<2x128xf32>
    %76 = math.tanh %70 : vector<2x128xf32>
    %77 = vector.extract_strided_slice %75 {offsets = [0, 0], sizes = [2, 32], strides = [1, 1]} : vector<2x128xf32> to vector<2x32xf32>
    %78 = vector.extract_strided_slice %75 {offsets = [0, 32], sizes = [2, 32], strides = [1, 1]} : vector<2x128xf32> to vector<2x32xf32>
    %79 = vector.extract_strided_slice %76 {offsets = [0, 64], sizes = [2, 32], strides = [1, 1]} : vector<2x128xf32> to vector<2x32xf32>
    %80 = vector.extract_strided_slice %75 {offsets = [0, 96], sizes = [2, 32], strides = [1, 1]} : vector<2x128xf32> to vector<2x32xf32>
    %81 = arith.mulf %78, %65 : vector<2x32xf32>
    %82 = arith.mulf %77, %79 : vector<2x32xf32>
    %83 = arith.addf %81, %82 : vector<2x32xf32>
    %84 = math.tanh %83 : vector<2x32xf32>
    %85 = arith.mulf %80, %84 : vector<2x32xf32>
    %86 = vector.extract_strided_slice %11 {offsets = [8, 0], sizes = [2, 128], strides = [1, 1]} : vector<16x128xf32> to vector<2x128xf32>
    %cst_17 = arith.constant dense<0.000000e+00> : vector<2x128xf32>
    %87 = tpu.matmul %85, %8, %cst_17 {dimension_numbers = #tpu.dot_dimension_numbers<[1], [0], [0], [1], [0, 0, 1, 1], [], []>} : vector<2x32xf32>, vector<32x128xf32>, vector<2x128xf32> -> vector<2x128xf32>
    %88 = arith.addf %86, %87 : vector<2x128xf32>
    %89 = arith.negf %88 : vector<2x128xf32>
    %90 = math.exp %89 : vector<2x128xf32>
    %cst_18 = arith.constant 1.000000e+00 : f32
    %91 = vector.broadcast %cst_18 : f32 to vector<2x128xf32>
    %92 = arith.addf %91, %90 : vector<2x128xf32>
    %93 = arith.divf %91, %92 : vector<2x128xf32>
    %94 = math.tanh %88 : vector<2x128xf32>
    %95 = vector.extract_strided_slice %93 {offsets = [0, 0], sizes = [2, 32], strides = [1, 1]} : vector<2x128xf32> to vector<2x32xf32>
    %96 = vector.extract_strided_slice %93 {offsets = [0, 32], sizes = [2, 32], strides = [1, 1]} : vector<2x128xf32> to vector<2x32xf32>
    %97 = vector.extract_strided_slice %94 {offsets = [0, 64], sizes = [2, 32], strides = [1, 1]} : vector<2x128xf32> to vector<2x32xf32>
    %98 = vector.extract_strided_slice %93 {offsets = [0, 96], sizes = [2, 32], strides = [1, 1]} : vector<2x128xf32> to vector<2x32xf32>
    %99 = arith.mulf %96, %83 : vector<2x32xf32>
    %100 = arith.mulf %95, %97 : vector<2x32xf32>
    %101 = arith.addf %99, %100 : vector<2x32xf32>
    %102 = math.tanh %101 : vector<2x32xf32>
    %103 = arith.mulf %98, %102 : vector<2x32xf32>
    %104 = vector.extract_strided_slice %11 {offsets = [10, 0], sizes = [2, 128], strides = [1, 1]} : vector<16x128xf32> to vector<2x128xf32>
    %cst_19 = arith.constant dense<0.000000e+00> : vector<2x128xf32>
    %105 = tpu.matmul %103, %8, %cst_19 {dimension_numbers = #tpu.dot_dimension_numbers<[1], [0], [0], [1], [0, 0, 1, 1], [], []>} : vector<2x32xf32>, vector<32x128xf32>, vector<2x128xf32> -> vector<2x128xf32>
    %106 = arith.addf %104, %105 : vector<2x128xf32>
    %107 = arith.negf %106 : vector<2x128xf32>
    %108 = math.exp %107 : vector<2x128xf32>
    %cst_20 = arith.constant 1.000000e+00 : f32
    %109 = vector.broadcast %cst_20 : f32 to vector<2x128xf32>
    %110 = arith.addf %109, %108 : vector<2x128xf32>
    %111 = arith.divf %109, %110 : vector<2x128xf32>
    %112 = math.tanh %106 : vector<2x128xf32>
    %113 = vector.extract_strided_slice %111 {offsets = [0, 0], sizes = [2, 32], strides = [1, 1]} : vector<2x128xf32> to vector<2x32xf32>
    %114 = vector.extract_strided_slice %111 {offsets = [0, 32], sizes = [2, 32], strides = [1, 1]} : vector<2x128xf32> to vector<2x32xf32>
    %115 = vector.extract_strided_slice %112 {offsets = [0, 64], sizes = [2, 32], strides = [1, 1]} : vector<2x128xf32> to vector<2x32xf32>
    %116 = vector.extract_strided_slice %111 {offsets = [0, 96], sizes = [2, 32], strides = [1, 1]} : vector<2x128xf32> to vector<2x32xf32>
    %117 = arith.mulf %114, %101 : vector<2x32xf32>
    %118 = arith.mulf %113, %115 : vector<2x32xf32>
    %119 = arith.addf %117, %118 : vector<2x32xf32>
    %120 = math.tanh %119 : vector<2x32xf32>
    %121 = arith.mulf %116, %120 : vector<2x32xf32>
    %122 = vector.extract_strided_slice %11 {offsets = [12, 0], sizes = [2, 128], strides = [1, 1]} : vector<16x128xf32> to vector<2x128xf32>
    %cst_21 = arith.constant dense<0.000000e+00> : vector<2x128xf32>
    %123 = tpu.matmul %121, %8, %cst_21 {dimension_numbers = #tpu.dot_dimension_numbers<[1], [0], [0], [1], [0, 0, 1, 1], [], []>} : vector<2x32xf32>, vector<32x128xf32>, vector<2x128xf32> -> vector<2x128xf32>
    %124 = arith.addf %122, %123 : vector<2x128xf32>
    %125 = arith.negf %124 : vector<2x128xf32>
    %126 = math.exp %125 : vector<2x128xf32>
    %cst_22 = arith.constant 1.000000e+00 : f32
    %127 = vector.broadcast %cst_22 : f32 to vector<2x128xf32>
    %128 = arith.addf %127, %126 : vector<2x128xf32>
    %129 = arith.divf %127, %128 : vector<2x128xf32>
    %130 = math.tanh %124 : vector<2x128xf32>
    %131 = vector.extract_strided_slice %129 {offsets = [0, 0], sizes = [2, 32], strides = [1, 1]} : vector<2x128xf32> to vector<2x32xf32>
    %132 = vector.extract_strided_slice %129 {offsets = [0, 32], sizes = [2, 32], strides = [1, 1]} : vector<2x128xf32> to vector<2x32xf32>
    %133 = vector.extract_strided_slice %130 {offsets = [0, 64], sizes = [2, 32], strides = [1, 1]} : vector<2x128xf32> to vector<2x32xf32>
    %134 = vector.extract_strided_slice %129 {offsets = [0, 96], sizes = [2, 32], strides = [1, 1]} : vector<2x128xf32> to vector<2x32xf32>
    %135 = arith.mulf %132, %119 : vector<2x32xf32>
    %136 = arith.mulf %131, %133 : vector<2x32xf32>
    %137 = arith.addf %135, %136 : vector<2x32xf32>
    %138 = math.tanh %137 : vector<2x32xf32>
    %139 = arith.mulf %134, %138 : vector<2x32xf32>
    %140 = vector.extract_strided_slice %11 {offsets = [14, 0], sizes = [2, 128], strides = [1, 1]} : vector<16x128xf32> to vector<2x128xf32>
    %cst_23 = arith.constant dense<0.000000e+00> : vector<2x128xf32>
    %141 = tpu.matmul %139, %8, %cst_23 {dimension_numbers = #tpu.dot_dimension_numbers<[1], [0], [0], [1], [0, 0, 1, 1], [], []>} : vector<2x32xf32>, vector<32x128xf32>, vector<2x128xf32> -> vector<2x128xf32>
    %142 = arith.addf %140, %141 : vector<2x128xf32>
    %143 = arith.negf %142 : vector<2x128xf32>
    %144 = math.exp %143 : vector<2x128xf32>
    %cst_24 = arith.constant 1.000000e+00 : f32
    %145 = vector.broadcast %cst_24 : f32 to vector<2x128xf32>
    %146 = arith.addf %145, %144 : vector<2x128xf32>
    %147 = arith.divf %145, %146 : vector<2x128xf32>
    %148 = math.tanh %142 : vector<2x128xf32>
    %149 = vector.extract_strided_slice %147 {offsets = [0, 0], sizes = [2, 32], strides = [1, 1]} : vector<2x128xf32> to vector<2x32xf32>
    %150 = vector.extract_strided_slice %147 {offsets = [0, 32], sizes = [2, 32], strides = [1, 1]} : vector<2x128xf32> to vector<2x32xf32>
    %151 = vector.extract_strided_slice %148 {offsets = [0, 64], sizes = [2, 32], strides = [1, 1]} : vector<2x128xf32> to vector<2x32xf32>
    %152 = vector.extract_strided_slice %147 {offsets = [0, 96], sizes = [2, 32], strides = [1, 1]} : vector<2x128xf32> to vector<2x32xf32>
    %153 = arith.mulf %150, %137 : vector<2x32xf32>
    %154 = arith.mulf %149, %151 : vector<2x32xf32>
    %155 = arith.addf %153, %154 : vector<2x32xf32>
    %156 = math.tanh %155 : vector<2x32xf32>
    %157 = arith.mulf %152, %156 : vector<2x32xf32>
    %158 = tpu.concatenate %31, %49, %67, %85, %103, %121, %139, %157 in 0 : vector<2x32xf32>, vector<2x32xf32>, vector<2x32xf32>, vector<2x32xf32>, vector<2x32xf32>, vector<2x32xf32>, vector<2x32xf32>, vector<2x32xf32> -> vector<16x32xf32>
    %c0_25 = arith.constant 0 : index
    %c0_26 = arith.constant 0 : index
    %159 = vector.load %arg4[%c0_25, %c0_26] : memref<32x128xf32, #tpu.memory_space<vmem>>, vector<32x128xf32>
    %c0_27 = arith.constant 0 : index
    %c0_28 = arith.constant 0 : index
    %160 = vector.load %arg5[%c0_27, %c0_28] : memref<1x128xf32, #tpu.memory_space<vmem>>, vector<1x128xf32>
    %c0_29 = arith.constant 0 : index
    %c0_30 = arith.constant 0 : index
    %161 = vector.load %arg6[%c0_29, %c0_30] : memref<32x128xf32, #tpu.memory_space<vmem>>, vector<32x128xf32>
    %cst_31 = arith.constant dense<0.000000e+00> : vector<16x128xf32>
    %162 = tpu.matmul %158, %159, %cst_31 {dimension_numbers = #tpu.dot_dimension_numbers<[1], [0], [0], [1], [0, 0, 1, 1], [], []>} : vector<16x32xf32>, vector<32x128xf32>, vector<16x128xf32> -> vector<16x128xf32>
    %163 = vector.broadcast %160 : vector<1x128xf32> to vector<16x128xf32>
    %164 = arith.addf %162, %163 : vector<16x128xf32>
    %cst_32 = arith.constant 0.000000e+00 : f32
    %165 = vector.broadcast %cst_32 : f32 to vector<2x32xf32>
    %cst_33 = arith.constant 0.000000e+00 : f32
    %166 = vector.broadcast %cst_33 : f32 to vector<2x32xf32>
    %167 = vector.extract_strided_slice %164 {offsets = [0, 0], sizes = [2, 128], strides = [1, 1]} : vector<16x128xf32> to vector<2x128xf32>
    %cst_34 = arith.constant dense<0.000000e+00> : vector<2x128xf32>
    %168 = tpu.matmul %165, %161, %cst_34 {dimension_numbers = #tpu.dot_dimension_numbers<[1], [0], [0], [1], [0, 0, 1, 1], [], []>} : vector<2x32xf32>, vector<32x128xf32>, vector<2x128xf32> -> vector<2x128xf32>
    %169 = arith.addf %167, %168 : vector<2x128xf32>
    %170 = arith.negf %169 : vector<2x128xf32>
    %171 = math.exp %170 : vector<2x128xf32>
    %cst_35 = arith.constant 1.000000e+00 : f32
    %172 = vector.broadcast %cst_35 : f32 to vector<2x128xf32>
    %173 = arith.addf %172, %171 : vector<2x128xf32>
    %174 = arith.divf %172, %173 : vector<2x128xf32>
    %175 = math.tanh %169 : vector<2x128xf32>
    %176 = vector.extract_strided_slice %174 {offsets = [0, 0], sizes = [2, 32], strides = [1, 1]} : vector<2x128xf32> to vector<2x32xf32>
    %177 = vector.extract_strided_slice %174 {offsets = [0, 32], sizes = [2, 32], strides = [1, 1]} : vector<2x128xf32> to vector<2x32xf32>
    %178 = vector.extract_strided_slice %175 {offsets = [0, 64], sizes = [2, 32], strides = [1, 1]} : vector<2x128xf32> to vector<2x32xf32>
    %179 = vector.extract_strided_slice %174 {offsets = [0, 96], sizes = [2, 32], strides = [1, 1]} : vector<2x128xf32> to vector<2x32xf32>
    %180 = arith.mulf %177, %166 : vector<2x32xf32>
    %181 = arith.mulf %176, %178 : vector<2x32xf32>
    %182 = arith.addf %180, %181 : vector<2x32xf32>
    %183 = math.tanh %182 : vector<2x32xf32>
    %184 = arith.mulf %179, %183 : vector<2x32xf32>
    %185 = vector.extract_strided_slice %164 {offsets = [2, 0], sizes = [2, 128], strides = [1, 1]} : vector<16x128xf32> to vector<2x128xf32>
    %cst_36 = arith.constant dense<0.000000e+00> : vector<2x128xf32>
    %186 = tpu.matmul %184, %161, %cst_36 {dimension_numbers = #tpu.dot_dimension_numbers<[1], [0], [0], [1], [0, 0, 1, 1], [], []>} : vector<2x32xf32>, vector<32x128xf32>, vector<2x128xf32> -> vector<2x128xf32>
    %187 = arith.addf %185, %186 : vector<2x128xf32>
    %188 = arith.negf %187 : vector<2x128xf32>
    %189 = math.exp %188 : vector<2x128xf32>
    %cst_37 = arith.constant 1.000000e+00 : f32
    %190 = vector.broadcast %cst_37 : f32 to vector<2x128xf32>
    %191 = arith.addf %190, %189 : vector<2x128xf32>
    %192 = arith.divf %190, %191 : vector<2x128xf32>
    %193 = math.tanh %187 : vector<2x128xf32>
    %194 = vector.extract_strided_slice %192 {offsets = [0, 0], sizes = [2, 32], strides = [1, 1]} : vector<2x128xf32> to vector<2x32xf32>
    %195 = vector.extract_strided_slice %192 {offsets = [0, 32], sizes = [2, 32], strides = [1, 1]} : vector<2x128xf32> to vector<2x32xf32>
    %196 = vector.extract_strided_slice %193 {offsets = [0, 64], sizes = [2, 32], strides = [1, 1]} : vector<2x128xf32> to vector<2x32xf32>
    %197 = vector.extract_strided_slice %192 {offsets = [0, 96], sizes = [2, 32], strides = [1, 1]} : vector<2x128xf32> to vector<2x32xf32>
    %198 = arith.mulf %195, %182 : vector<2x32xf32>
    %199 = arith.mulf %194, %196 : vector<2x32xf32>
    %200 = arith.addf %198, %199 : vector<2x32xf32>
    %201 = math.tanh %200 : vector<2x32xf32>
    %202 = arith.mulf %197, %201 : vector<2x32xf32>
    %203 = vector.extract_strided_slice %164 {offsets = [4, 0], sizes = [2, 128], strides = [1, 1]} : vector<16x128xf32> to vector<2x128xf32>
    %cst_38 = arith.constant dense<0.000000e+00> : vector<2x128xf32>
    %204 = tpu.matmul %202, %161, %cst_38 {dimension_numbers = #tpu.dot_dimension_numbers<[1], [0], [0], [1], [0, 0, 1, 1], [], []>} : vector<2x32xf32>, vector<32x128xf32>, vector<2x128xf32> -> vector<2x128xf32>
    %205 = arith.addf %203, %204 : vector<2x128xf32>
    %206 = arith.negf %205 : vector<2x128xf32>
    %207 = math.exp %206 : vector<2x128xf32>
    %cst_39 = arith.constant 1.000000e+00 : f32
    %208 = vector.broadcast %cst_39 : f32 to vector<2x128xf32>
    %209 = arith.addf %208, %207 : vector<2x128xf32>
    %210 = arith.divf %208, %209 : vector<2x128xf32>
    %211 = math.tanh %205 : vector<2x128xf32>
    %212 = vector.extract_strided_slice %210 {offsets = [0, 0], sizes = [2, 32], strides = [1, 1]} : vector<2x128xf32> to vector<2x32xf32>
    %213 = vector.extract_strided_slice %210 {offsets = [0, 32], sizes = [2, 32], strides = [1, 1]} : vector<2x128xf32> to vector<2x32xf32>
    %214 = vector.extract_strided_slice %211 {offsets = [0, 64], sizes = [2, 32], strides = [1, 1]} : vector<2x128xf32> to vector<2x32xf32>
    %215 = vector.extract_strided_slice %210 {offsets = [0, 96], sizes = [2, 32], strides = [1, 1]} : vector<2x128xf32> to vector<2x32xf32>
    %216 = arith.mulf %213, %200 : vector<2x32xf32>
    %217 = arith.mulf %212, %214 : vector<2x32xf32>
    %218 = arith.addf %216, %217 : vector<2x32xf32>
    %219 = math.tanh %218 : vector<2x32xf32>
    %220 = arith.mulf %215, %219 : vector<2x32xf32>
    %221 = vector.extract_strided_slice %164 {offsets = [6, 0], sizes = [2, 128], strides = [1, 1]} : vector<16x128xf32> to vector<2x128xf32>
    %cst_40 = arith.constant dense<0.000000e+00> : vector<2x128xf32>
    %222 = tpu.matmul %220, %161, %cst_40 {dimension_numbers = #tpu.dot_dimension_numbers<[1], [0], [0], [1], [0, 0, 1, 1], [], []>} : vector<2x32xf32>, vector<32x128xf32>, vector<2x128xf32> -> vector<2x128xf32>
    %223 = arith.addf %221, %222 : vector<2x128xf32>
    %224 = arith.negf %223 : vector<2x128xf32>
    %225 = math.exp %224 : vector<2x128xf32>
    %cst_41 = arith.constant 1.000000e+00 : f32
    %226 = vector.broadcast %cst_41 : f32 to vector<2x128xf32>
    %227 = arith.addf %226, %225 : vector<2x128xf32>
    %228 = arith.divf %226, %227 : vector<2x128xf32>
    %229 = math.tanh %223 : vector<2x128xf32>
    %230 = vector.extract_strided_slice %228 {offsets = [0, 0], sizes = [2, 32], strides = [1, 1]} : vector<2x128xf32> to vector<2x32xf32>
    %231 = vector.extract_strided_slice %228 {offsets = [0, 32], sizes = [2, 32], strides = [1, 1]} : vector<2x128xf32> to vector<2x32xf32>
    %232 = vector.extract_strided_slice %229 {offsets = [0, 64], sizes = [2, 32], strides = [1, 1]} : vector<2x128xf32> to vector<2x32xf32>
    %233 = vector.extract_strided_slice %228 {offsets = [0, 96], sizes = [2, 32], strides = [1, 1]} : vector<2x128xf32> to vector<2x32xf32>
    %234 = arith.mulf %231, %218 : vector<2x32xf32>
    %235 = arith.mulf %230, %232 : vector<2x32xf32>
    %236 = arith.addf %234, %235 : vector<2x32xf32>
    %237 = math.tanh %236 : vector<2x32xf32>
    %238 = arith.mulf %233, %237 : vector<2x32xf32>
    %239 = vector.extract_strided_slice %164 {offsets = [8, 0], sizes = [2, 128], strides = [1, 1]} : vector<16x128xf32> to vector<2x128xf32>
    %cst_42 = arith.constant dense<0.000000e+00> : vector<2x128xf32>
    %240 = tpu.matmul %238, %161, %cst_42 {dimension_numbers = #tpu.dot_dimension_numbers<[1], [0], [0], [1], [0, 0, 1, 1], [], []>} : vector<2x32xf32>, vector<32x128xf32>, vector<2x128xf32> -> vector<2x128xf32>
    %241 = arith.addf %239, %240 : vector<2x128xf32>
    %242 = arith.negf %241 : vector<2x128xf32>
    %243 = math.exp %242 : vector<2x128xf32>
    %cst_43 = arith.constant 1.000000e+00 : f32
    %244 = vector.broadcast %cst_43 : f32 to vector<2x128xf32>
    %245 = arith.addf %244, %243 : vector<2x128xf32>
    %246 = arith.divf %244, %245 : vector<2x128xf32>
    %247 = math.tanh %241 : vector<2x128xf32>
    %248 = vector.extract_strided_slice %246 {offsets = [0, 0], sizes = [2, 32], strides = [1, 1]} : vector<2x128xf32> to vector<2x32xf32>
    %249 = vector.extract_strided_slice %246 {offsets = [0, 32], sizes = [2, 32], strides = [1, 1]} : vector<2x128xf32> to vector<2x32xf32>
    %250 = vector.extract_strided_slice %247 {offsets = [0, 64], sizes = [2, 32], strides = [1, 1]} : vector<2x128xf32> to vector<2x32xf32>
    %251 = vector.extract_strided_slice %246 {offsets = [0, 96], sizes = [2, 32], strides = [1, 1]} : vector<2x128xf32> to vector<2x32xf32>
    %252 = arith.mulf %249, %236 : vector<2x32xf32>
    %253 = arith.mulf %248, %250 : vector<2x32xf32>
    %254 = arith.addf %252, %253 : vector<2x32xf32>
    %255 = math.tanh %254 : vector<2x32xf32>
    %256 = arith.mulf %251, %255 : vector<2x32xf32>
    %257 = vector.extract_strided_slice %164 {offsets = [10, 0], sizes = [2, 128], strides = [1, 1]} : vector<16x128xf32> to vector<2x128xf32>
    %cst_44 = arith.constant dense<0.000000e+00> : vector<2x128xf32>
    %258 = tpu.matmul %256, %161, %cst_44 {dimension_numbers = #tpu.dot_dimension_numbers<[1], [0], [0], [1], [0, 0, 1, 1], [], []>} : vector<2x32xf32>, vector<32x128xf32>, vector<2x128xf32> -> vector<2x128xf32>
    %259 = arith.addf %257, %258 : vector<2x128xf32>
    %260 = arith.negf %259 : vector<2x128xf32>
    %261 = math.exp %260 : vector<2x128xf32>
    %cst_45 = arith.constant 1.000000e+00 : f32
    %262 = vector.broadcast %cst_45 : f32 to vector<2x128xf32>
    %263 = arith.addf %262, %261 : vector<2x128xf32>
    %264 = arith.divf %262, %263 : vector<2x128xf32>
    %265 = math.tanh %259 : vector<2x128xf32>
    %266 = vector.extract_strided_slice %264 {offsets = [0, 0], sizes = [2, 32], strides = [1, 1]} : vector<2x128xf32> to vector<2x32xf32>
    %267 = vector.extract_strided_slice %264 {offsets = [0, 32], sizes = [2, 32], strides = [1, 1]} : vector<2x128xf32> to vector<2x32xf32>
    %268 = vector.extract_strided_slice %265 {offsets = [0, 64], sizes = [2, 32], strides = [1, 1]} : vector<2x128xf32> to vector<2x32xf32>
    %269 = vector.extract_strided_slice %264 {offsets = [0, 96], sizes = [2, 32], strides = [1, 1]} : vector<2x128xf32> to vector<2x32xf32>
    %270 = arith.mulf %267, %254 : vector<2x32xf32>
    %271 = arith.mulf %266, %268 : vector<2x32xf32>
    %272 = arith.addf %270, %271 : vector<2x32xf32>
    %273 = math.tanh %272 : vector<2x32xf32>
    %274 = arith.mulf %269, %273 : vector<2x32xf32>
    %275 = vector.extract_strided_slice %164 {offsets = [12, 0], sizes = [2, 128], strides = [1, 1]} : vector<16x128xf32> to vector<2x128xf32>
    %cst_46 = arith.constant dense<0.000000e+00> : vector<2x128xf32>
    %276 = tpu.matmul %274, %161, %cst_46 {dimension_numbers = #tpu.dot_dimension_numbers<[1], [0], [0], [1], [0, 0, 1, 1], [], []>} : vector<2x32xf32>, vector<32x128xf32>, vector<2x128xf32> -> vector<2x128xf32>
    %277 = arith.addf %275, %276 : vector<2x128xf32>
    %278 = arith.negf %277 : vector<2x128xf32>
    %279 = math.exp %278 : vector<2x128xf32>
    %cst_47 = arith.constant 1.000000e+00 : f32
    %280 = vector.broadcast %cst_47 : f32 to vector<2x128xf32>
    %281 = arith.addf %280, %279 : vector<2x128xf32>
    %282 = arith.divf %280, %281 : vector<2x128xf32>
    %283 = math.tanh %277 : vector<2x128xf32>
    %284 = vector.extract_strided_slice %282 {offsets = [0, 0], sizes = [2, 32], strides = [1, 1]} : vector<2x128xf32> to vector<2x32xf32>
    %285 = vector.extract_strided_slice %282 {offsets = [0, 32], sizes = [2, 32], strides = [1, 1]} : vector<2x128xf32> to vector<2x32xf32>
    %286 = vector.extract_strided_slice %283 {offsets = [0, 64], sizes = [2, 32], strides = [1, 1]} : vector<2x128xf32> to vector<2x32xf32>
    %287 = vector.extract_strided_slice %282 {offsets = [0, 96], sizes = [2, 32], strides = [1, 1]} : vector<2x128xf32> to vector<2x32xf32>
    %288 = arith.mulf %285, %272 : vector<2x32xf32>
    %289 = arith.mulf %284, %286 : vector<2x32xf32>
    %290 = arith.addf %288, %289 : vector<2x32xf32>
    %291 = math.tanh %290 : vector<2x32xf32>
    %292 = arith.mulf %287, %291 : vector<2x32xf32>
    %293 = vector.extract_strided_slice %164 {offsets = [14, 0], sizes = [2, 128], strides = [1, 1]} : vector<16x128xf32> to vector<2x128xf32>
    %cst_48 = arith.constant dense<0.000000e+00> : vector<2x128xf32>
    %294 = tpu.matmul %292, %161, %cst_48 {dimension_numbers = #tpu.dot_dimension_numbers<[1], [0], [0], [1], [0, 0, 1, 1], [], []>} : vector<2x32xf32>, vector<32x128xf32>, vector<2x128xf32> -> vector<2x128xf32>
    %295 = arith.addf %293, %294 : vector<2x128xf32>
    %296 = arith.negf %295 : vector<2x128xf32>
    %297 = math.exp %296 : vector<2x128xf32>
    %cst_49 = arith.constant 1.000000e+00 : f32
    %298 = vector.broadcast %cst_49 : f32 to vector<2x128xf32>
    %299 = arith.addf %298, %297 : vector<2x128xf32>
    %300 = arith.divf %298, %299 : vector<2x128xf32>
    %301 = math.tanh %295 : vector<2x128xf32>
    %302 = vector.extract_strided_slice %300 {offsets = [0, 0], sizes = [2, 32], strides = [1, 1]} : vector<2x128xf32> to vector<2x32xf32>
    %303 = vector.extract_strided_slice %300 {offsets = [0, 32], sizes = [2, 32], strides = [1, 1]} : vector<2x128xf32> to vector<2x32xf32>
    %304 = vector.extract_strided_slice %301 {offsets = [0, 64], sizes = [2, 32], strides = [1, 1]} : vector<2x128xf32> to vector<2x32xf32>
    %305 = vector.extract_strided_slice %300 {offsets = [0, 96], sizes = [2, 32], strides = [1, 1]} : vector<2x128xf32> to vector<2x32xf32>
    %306 = arith.mulf %303, %290 : vector<2x32xf32>
    %307 = arith.mulf %302, %304 : vector<2x32xf32>
    %308 = arith.addf %306, %307 : vector<2x32xf32>
    %309 = math.tanh %308 : vector<2x32xf32>
    %310 = arith.mulf %305, %309 : vector<2x32xf32>
    %c0_50 = arith.constant 0 : index
    %c0_51 = arith.constant 0 : index
    %311 = vector.load %arg7[%c0_50, %c0_51] : memref<32x32xf32, #tpu.memory_space<vmem>>, vector<32x32xf32>
    %cst_52 = arith.constant dense<0.000000e+00> : vector<2x32xf32>
    %312 = tpu.matmul %310, %311, %cst_52 {dimension_numbers = #tpu.dot_dimension_numbers<[1], [0], [0], [1], [0, 0, 1, 1], [], []>} : vector<2x32xf32>, vector<32x32xf32>, vector<2x32xf32> -> vector<2x32xf32>
    %c0_53 = arith.constant 0 : index
    %c0_54 = arith.constant 0 : index
    %313 = vector.load %arg8[%c0_53, %c0_54] : memref<1x32xf32, #tpu.memory_space<vmem>>, vector<1x32xf32>
    %314 = vector.broadcast %313 : vector<1x32xf32> to vector<2x32xf32>
    %315 = arith.addf %312, %314 : vector<2x32xf32>
    %cst_55 = arith.constant 0.000000e+00 : f32
    %316 = vector.broadcast %cst_55 : f32 to vector<2x32xf32>
    %317 = arith.maximumf %315, %316 : vector<2x32xf32>
    %c0_56 = arith.constant 0 : index
    %c0_57 = arith.constant 0 : index
    %318 = vector.load %arg9[%c0_56, %c0_57] : memref<32x16xf32, #tpu.memory_space<vmem>>, vector<32x16xf32>
    %cst_58 = arith.constant dense<0.000000e+00> : vector<2x16xf32>
    %319 = tpu.matmul %317, %318, %cst_58 {dimension_numbers = #tpu.dot_dimension_numbers<[1], [0], [0], [1], [0, 0, 1, 1], [], []>} : vector<2x32xf32>, vector<32x16xf32>, vector<2x16xf32> -> vector<2x16xf32>
    %c0_59 = arith.constant 0 : index
    %c0_60 = arith.constant 0 : index
    %320 = vector.load %arg10[%c0_59, %c0_60] : memref<1x16xf32, #tpu.memory_space<vmem>>, vector<1x16xf32>
    %321 = vector.broadcast %320 : vector<1x16xf32> to vector<2x16xf32>
    %322 = arith.addf %319, %321 : vector<2x16xf32>
    %c0_61 = arith.constant 0 : index
    %c0_62 = arith.constant 0 : index
    %323 = vector.load %arg11[%c0_61, %c0_62] : memref<2x16xf32, #tpu.memory_space<vmem>>, vector<2x16xf32>
    tpu.vector_store %arg11[%c0_61, %c0_62], %322 {strides = array<i32>} : memref<2x16xf32, #tpu.memory_space<vmem>>, vector<2x16xf32>,
    return
  }
}

</mosaic_0001>

<llo_original>
// kernel: tpu_custom_call.1
$region0: #{tpu_custom_call.1}
  #allocation0 [shape = 'u32[]', space=smem, size = 0x4, offset = 0x4, fixed_abs, tag = 'smem constant byte address 0x4 - core index']
  #allocation1 [shape = 'u32[144,128]{1,0:T(1,128)}', space=vmem, size = 0x12000, scoped, tag = 'internal scratch']
  %s0 = inlined_call_operand.vmem [shape: s32[16,1], index: 0, kind: input, shape index: {}]
  %s1 = inlined_call_operand.hbm [shape: f32[16,128], index: 1, kind: input, shape index: {}]
  %s2 = inlined_call_operand.hbm [shape: f32[1,128], index: 2, kind: input, shape index: {}]
  %s3 = inlined_call_operand.vmem [shape: f32[32,128], index: 3, kind: input, shape index: {}]
  %s4 = inlined_call_operand.vmem [shape: f32[32,128], index: 4, kind: input, shape index: {}]
  %s5 = inlined_call_operand.vmem [shape: f32[1,128], index: 5, kind: input, shape index: {}]
  %s6 = inlined_call_operand.hbm [shape: f32[32,128], index: 6, kind: input, shape index: {}]
  %s7 = inlined_call_operand.hbm [shape: f32[32,32], index: 7, kind: input, shape index: {}]
  %s8 = inlined_call_operand.vmem [shape: f32[1,32], index: 8, kind: input, shape index: {}]
  %s9 = inlined_call_operand.vmem [shape: f32[32,16], index: 9, kind: input, shape index: {}]
  %s10 = inlined_call_operand.vmem [shape: f32[1,16], index: 10, kind: input, shape index: {}]
  %s11 = inlined_call_operand.hbm [shape: f32[2,16], index: 11, kind: output, shape index: {}]
  %s12 = sld [smem:[#allocation0]]
  $region70: #{tpu_custom_call.1} parent=0
    _
  %s14 = ssub.s32 1, %s12
  %s15 = scalar_select 0, %s14, %s12
  $region1: #{tpu_custom_call.1} parent=0
    #allocation2 [shape = 'u8[8192]{0}', space=vmem, size = 0x2000, scoped, tag = 'input window, operand 1, single buffered']
    #allocation3 [shape = 's32[1]{0}', space=sflag, size = 0x4, scoped, tag = 'scoped memory for tpu_custom_call.1']
    #allocation4 [shape = 's32[1]{0}', space=sflag, size = 0x4, scoped, tag = 'scoped memory for tpu_custom_call.1']
    #allocation5 [shape = 'u8[512]{0}', space=vmem, size = 0x400, scoped, tag = 'input window, operand 2, single buffered']
    #allocation6 [shape = 's32[1]{0}', space=sflag, size = 0x4, scoped, tag = 'scoped memory for tpu_custom_call.1']
    #allocation7 [shape = 'u8[16384]{0}', space=vmem, size = 0x4000, scoped, tag = 'input window, operand 6, single buffered']
    #allocation8 [shape = 'u8[16384]{0}', space=vmem, size = 0x4000, scoped, tag = 'input window, operand 7, single buffered']
    #allocation9 [shape = 's32[1]{0}', space=sflag, size = 0x4, scoped, tag = 'scoped memory for tpu_custom_call.1']
    #allocation10 [shape = 'u8[1024]{0}', space=vmem, size = 0x400, scoped, tag = 'output window, operand 0, single buffered']
    %16 = vsyncpa [#allocation3], 0
    %17 = vsyncpa [#allocation6], 0
    %18 = vsyncpa [#allocation9], 0
    %19 = vsyncpa [#allocation4], 0
    // Predicated region
    $region2: #{tpu_custom_call.1} parent=1 // pred_check
      _
    $region3: #{tpu_custom_call.1} parent=1 // pred_check_branch
      %21 = sbr.rel (0) target = $region5
    $region4: #{tpu_custom_call.1} parent=1 // pred_region
      _
    $region5: #{tpu_custom_call.1} parent=1 // pred_fallthru
      _
    // Predicated region
    $region6: #{tpu_custom_call.1} parent=1 // pred_check
      _
    $region7: #{tpu_custom_call.1} parent=1 // pred_check_branch
      %23 = sbr.rel (0) target = $region9
    $region8: #{tpu_custom_call.1} parent=1 // pred_region
      %s25 = ssub.s32 256, 256
      %26 = vsyncadd [#allocation3], %s25
      %s27 = sshll.u32 [#allocation2], 4
      %s28 = int_to_ptr.vmem [resolvable:$true] %s27
      %33 = dma.hbm_to_vmem [thread:$0]  %s1, 256, %s28, [#allocation3], 128, 128, 8
    $region9: #{tpu_custom_call.1} parent=1 // pred_fallthru
      _
    // Predicated region
    $region10: #{tpu_custom_call.1} parent=1 // pred_check
      _
    $region11: #{tpu_custom_call.1} parent=1 // pred_check_branch
      %35 = sbr.rel (0) target = $region13
    $region12: #{tpu_custom_call.1} parent=1 // pred_region
      %s37 = ssub.s32 16, 16
      %38 = vsyncadd [#allocation6], %s37
      %s40 = sshll.u32 [#allocation5], 4
      %s41 = int_to_ptr.vmem [resolvable:$true] %s40
      %43 = dma.hbm_to_vmem [thread:$0]  %s2, 16, %s41, [#allocation6]
    $region13: #{tpu_custom_call.1} parent=1 // pred_fallthru
      _
    // Predicated region
    $region14: #{tpu_custom_call.1} parent=1 // pred_check
      _
    $region15: #{tpu_custom_call.1} parent=1 // pred_check_branch
      %45 = sbr.rel (0) target = $region17
    $region16: #{tpu_custom_call.1} parent=1 // pred_region
      _
    $region17: #{tpu_custom_call.1} parent=1 // pred_fallthru
      _
    // Predicated region
    $region18: #{tpu_custom_call.1} parent=1 // pred_check
      _
    $region19: #{tpu_custom_call.1} parent=1 // pred_check_branch
      %47 = sbr.rel (0) target = $region21
    $region20: #{tpu_custom_call.1} parent=1 // pred_region
      _
    $region21: #{tpu_custom_call.1} parent=1 // pred_fallthru
      _
    // Predicated region
    $region22: #{tpu_custom_call.1} parent=1 // pred_check
      _
    $region23: #{tpu_custom_call.1} parent=1 // pred_check_branch
      %49 = sbr.rel (0) target = $region25
    $region24: #{tpu_custom_call.1} parent=1 // pred_region
      _
    $region25: #{tpu_custom_call.1} parent=1 // pred_fallthru
      _
    // Predicated region
    $region26: #{tpu_custom_call.1} parent=1 // pred_check
      _
    $region27: #{tpu_custom_call.1} parent=1 // pred_check_branch
      %51 = sbr.rel (0) target = $region29
    $region28: #{tpu_custom_call.1} parent=1 // pred_region
      %s53 = ssub.s32 512, 512
      %54 = vsyncadd [#allocation6], %s53
      %s55 = sshll.u32 [#allocation7], 4
      %s56 = int_to_ptr.vmem [resolvable:$true] %s55
      %61 = dma.hbm_to_vmem [thread:$0]  %s6, 512, %s56, [#allocation6], 128, 128, 8
    $region29: #{tpu_custom_call.1} parent=1 // pred_fallthru
      _
    // Predicated region
    $region30: #{tpu_custom_call.1} parent=1 // pred_check
      _
    $region31: #{tpu_custom_call.1} parent=1 // pred_check_branch
      %63 = sbr.rel (0) target = $region33
    $region32: #{tpu_custom_call.1} parent=1 // pred_region
      %s65 = ssub.s32 512, 512
      %66 = vsyncadd [#allocation9], %s65
      %s67 = sshll.u32 [#allocation8], 4
      %s68 = int_to_ptr.vmem [resolvable:$true] %s67
      %73 = dma.hbm_to_vmem [thread:$0]  %s7, 512, %s68, [#allocation9], 128, 128, 8
    $region33: #{tpu_custom_call.1} parent=1 // pred_fallthru
      _
    // Predicated region
    $region34: #{tpu_custom_call.1} parent=1 // pred_check
      _
    $region35: #{tpu_custom_call.1} parent=1 // pred_check_branch
      %75 = sbr.rel (0) target = $region37
    $region36: #{tpu_custom_call.1} parent=1 // pred_region
      _
    $region37: #{tpu_custom_call.1} parent=1 // pred_fallthru
      _
    // Predicated region
    $region38: #{tpu_custom_call.1} parent=1 // pred_check
      _
    $region39: #{tpu_custom_call.1} parent=1 // pred_check_branch
      %77 = sbr.rel (0) target = $region41
    $region40: #{tpu_custom_call.1} parent=1 // pred_region
      _
    $region41: #{tpu_custom_call.1} parent=1 // pred_fallthru
      _
    // Predicated region
    $region42: #{tpu_custom_call.1} parent=1 // pred_check
      _
    $region43: #{tpu_custom_call.1} parent=1 // pred_check_branch
      %79 = sbr.rel (0) target = $region45
    $region44: #{tpu_custom_call.1} parent=1 // pred_region
      _
    $region45: #{tpu_custom_call.1} parent=1 // pred_fallthru
      _
    // Predicated region
    $region46: #{tpu_custom_call.1} parent=1 // pred_check
      _
    $region47: #{tpu_custom_call.1} parent=1 // pred_check_branch
      %81 = sbr.rel (0) target = $region49
    $region48: #{tpu_custom_call.1} parent=1 // pred_region
      %82 = dma.done [#allocation3], 256
    $region49: #{tpu_custom_call.1} parent=1 // pred_fallthru
      _
    // Predicated region
    $region50: #{tpu_custom_call.1} parent=1 // pred_check
      _
    $region51: #{tpu_custom_call.1} parent=1 // pred_check_branch
      %84 = sbr.rel (0) target = $region53
    $region52: #{tpu_custom_call.1} parent=1 // pred_region
      %85 = dma.done [#allocation6], 16
    $region53: #{tpu_custom_call.1} parent=1 // pred_fallthru
      _
    // Predicated region
    $region54: #{tpu_custom_call.1} parent=1 // pred_check
      _
    $region55: #{tpu_custom_call.1} parent=1 // pred_check_branch
      %87 = sbr.rel (0) target = $region57
    $region56: #{tpu_custom_call.1} parent=1 // pred_region
      %88 = dma.done [#allocation6], 512
    $region57: #{tpu_custom_call.1} parent=1 // pred_fallthru
      _
    // Predicated region
    $region58: #{tpu_custom_call.1} parent=1 // pred_check
      _
    $region59: #{tpu_custom_call.1} parent=1 // pred_check_branch
      %90 = sbr.rel (0) target = $region61
    $region60: #{tpu_custom_call.1} parent=1 // pred_region
      %91 = dma.done [#allocation9], 512
    $region61: #{tpu_custom_call.1} parent=1 // pred_fallthru
      _
    %v92 = vld [vmem:[%s0] sm:$0xff]
    %v93 = vld [vmem:[%s0 + $0x8] sm:$0xff]
    %v94 = vlaneseq
    %v95 = vand.u32 %v94, 127
    %96 = vset.pattern.permute.xlu0 0
    %97 = vperm.xlu0 %96, %v92
    %v98 = vpop.permute.xlu0 %97
    %99 = vset.pattern.permute.xlu0 0
    %100 = vperm.xlu0 %99, %v93
    %v101 = vpop.permute.xlu0 %100
    %vm102 = vcmp.eq.s32.totalorder %v98, %v95
    %vm103 = vcmp.eq.s32.totalorder %v101, %v95
    %v104 = vsel %vm102, 1, 0
    %v105 = vsel %vm103, 1, 0
    %v106 = vcvt.s32.f32 %v104
    %v107 = vcvt.s32.f32 %v105
    %v108 = vld [vmem:[#allocation2] sm:$0xff]
    %v109 = vld [vmem:[#allocation2 + $0x8] sm:$0xff]
    %v110 = vld [vmem:[#allocation5] sm:$0x1]
    %v111 = vld [vmem:[%s3] sm:$0xff]
    %v112 = vld [vmem:[%s3 + $0x8] sm:$0xff]
    %v113 = vld [vmem:[%s3 + $0x10] sm:$0xff]
    %v114 = vld [vmem:[%s3 + $0x18] sm:$0xff]
    %v116 = vlaneseq
    %v117 = vshrl.u32 %v116, 7
    %v118 = vsub.s32 0, %v117
    %v119 = vrot.slane %v110, %v118
    %vm121 = vcmask 130048
    %v123 = vsel %vm121, %v106, 0
    %v126 = vsel %vm121, %v107, 0
    %128 = vmatprep.subr.mxu0 0.0
    %129 = vmatpush1.msra.mxu0 %v108
    %130 = vmatprep.subr.mxu0 0.0
    %131 = vmatpush1.msra.mxu0 %v109
    %132 = vmatprep.subr.mxu0 0.0
    %133 = vmatpush1.msra.mxu0 0.0
    %134 = vmatprep.subr.mxu0 0.0
    %135 = vmatpush1.msra.mxu0 0.0
    %136 = vmatprep.subr.mxu0 0.0
    %137 = vmatpush1.msra.mxu0 0.0
    %138 = vmatprep.subr.mxu0 0.0
    %139 = vmatpush1.msra.mxu0 0.0
    %140 = vmatprep.subr.mxu0 0.0
    %141 = vmatpush1.msra.mxu0 0.0
    %142 = vmatprep.subr.mxu0 0.0
    %143 = vmatpush1.msra.mxu0 0.0
    %144 = vmatprep.subr.mxu0 0.0
    %145 = vmatpush1.msra.mxu0 0.0
    %146 = vmatprep.subr.mxu0 0.0
    %147 = vmatpush1.msra.mxu0 0.0
    %148 = vmatprep.subr.mxu0 0.0
    %149 = vmatpush1.msra.mxu0 0.0
    %150 = vmatprep.subr.mxu0 0.0
    %151 = vmatpush1.msra.mxu0 0.0
    %152 = vmatprep.subr.mxu0 0.0
    %153 = vmatpush1.msra.mxu0 0.0
    %154 = vmatprep.subr.mxu0 0.0
    %155 = vmatpush1.msra.mxu0 0.0
    %156 = vmatprep.subr.mxu0 0.0
    %157 = vmatpush1.msra.mxu0 0.0
    %158 = vmatprep.subr.mxu0 0.0
    %159 = vmatpush1.msra.mxu0 0.0
    %160 = vmatprep.subr.mxu0 0.0
    %161 = vmatpush1.msra.mxu0 0.0
    %162 = vmatprep.subr.mxu0 0.0
    %163 = vmatpush1.msra.mxu0 0.0
    %164 = vmatprep.subr.mxu0 0.0
    %165 = vmatpush1.msra.mxu0 0.0
    %166 = vmatprep.subr.mxu0 0.0
    %167 = vmatpush1.msra.mxu0 0.0
    %168 = vmatprep.subr.mxu0 0.0
    %169 = vmatpush1.msra.mxu0 0.0
    %170 = vmatprep.subr.mxu0 0.0
    %171 = vmatpush1.msra.mxu0 0.0
    %172 = vmatprep.subr.mxu0 0.0
    %173 = vmatpush1.msra.mxu0 0.0
    %174 = vmatprep.subr.mxu0 0.0
    %175 = vmatpush1.msra.mxu0 0.0
    %176 = vmatprep.subr.mxu0 0.0
    %177 = vmatpush1.msra.mxu0 0.0
    %178 = vmatprep.subr.mxu0 0.0
    %179 = vmatpush1.msra.mxu0 0.0
    %180 = vmatprep.subr.mxu0 0.0
    %181 = vmatpush1.msra.mxu0 0.0
    %182 = vmatprep.subr.mxu0 0.0
    %183 = vmatpush1.msra.mxu0 0.0
    %184 = vmatprep.subr.mxu0 0.0
    %185 = vmatpush1.msra.mxu0 0.0
    %186 = vmatprep.subr.mxu0 0.0
    %187 = vmatpush1.msra.mxu0 0.0
    %188 = vmatprep.subr.mxu0 0.0
    %189 = vmatpush1.msra.mxu0 0.0
    %190 = vmatprep.subr.mxu0 0.0
    %191 = vmatpush1.msra.mxu0 0.0
    %192 = vmatprep.mubr.f32.mxu0 0.0
    %193 = vmatmul.mubr.f32.gmra.mrb[0].mxu0 %v123
    %v194 = vpop.f32.mrb[0].mxu0
    %v195 = vadd.f32 %v119, %v194
    %v196 = vpop.f32.mrb[0].mxu0
    %197 = vmatprep.mubr.f32.mxu0 0.0
    %198 = vmatmul.mubr.f32.gmra.mrb[0].mxu0 %v126
    %v199 = vpop.f32.mrb[0].mxu0
    %v200 = vadd.f32 %v119, %v199
    %v201 = vpop.f32.mrb[0].mxu0
    %202 = vdwg.mxu0
    %vm203 = vcmask 261120
    %v205 = vsel %vm203, 0.0, 0
    %207 = vmatprep.subr.mxu0 0.0
    %208 = vmatpush1.msra.mxu0 %v111
    %209 = vmatprep.subr.mxu0 0.0
    %210 = vmatpush1.msra.mxu0 %v112
    %211 = vmatprep.subr.mxu0 0.0
    %212 = vmatpush1.msra.mxu0 %v113
    %213 = vmatprep.subr.mxu0 0.0
    %214 = vmatpush1.msra.mxu0 %v114
    %215 = vmatprep.subr.mxu0 0.0
    %216 = vmatpush1.msra.mxu0 0.0
    %217 = vmatprep.subr.mxu0 0.0
    %218 = vmatpush1.msra.mxu0 0.0
    %219 = vmatprep.subr.mxu0 0.0
    %220 = vmatpush1.msra.mxu0 0.0
    %221 = vmatprep.subr.mxu0 0.0
    %222 = vmatpush1.msra.mxu0 0.0
    %223 = vmatprep.subr.mxu0 0.0
    %224 = vmatpush1.msra.mxu0 0.0
    %225 = vmatprep.subr.mxu0 0.0
    %226 = vmatpush1.msra.mxu0 0.0
    %227 = vmatprep.subr.mxu0 0.0
    %228 = vmatpush1.msra.mxu0 0.0
    %229 = vmatprep.subr.mxu0 0.0
    %230 = vmatpush1.msra.mxu0 0.0
    %231 = vmatprep.subr.mxu0 0.0
    %232 = vmatpush1.msra.mxu0 0.0
    %233 = vmatprep.subr.mxu0 0.0
    %234 = vmatpush1.msra.mxu0 0.0
    %235 = vmatprep.subr.mxu0 0.0
    %236 = vmatpush1.msra.mxu0 0.0
    %237 = vmatprep.subr.mxu0 0.0
    %238 = vmatpush1.msra.mxu0 0.0
    %239 = vmatprep.subr.mxu0 0.0
    %240 = vmatpush1.msra.mxu0 0.0
    %241 = vmatprep.subr.mxu0 0.0
    %242 = vmatpush1.msra.mxu0 0.0
    %243 = vmatprep.subr.mxu0 0.0
    %244 = vmatpush1.msra.mxu0 0.0
    %245 = vmatprep.subr.mxu0 0.0
    %246 = vmatpush1.msra.mxu0 0.0
    %247 = vmatprep.subr.mxu0 0.0
    %248 = vmatpush1.msra.mxu0 0.0
    %249 = vmatprep.subr.mxu0 0.0
    %250 = vmatpush1.msra.mxu0 0.0
    %251 = vmatprep.subr.mxu0 0.0
    %252 = vmatpush1.msra.mxu0 0.0
    %253 = vmatprep.subr.mxu0 0.0
    %254 = vmatpush1.msra.mxu0 0.0
    %255 = vmatprep.subr.mxu0 0.0
    %256 = vmatpush1.msra.mxu0 0.0
    %257 = vmatprep.subr.mxu0 0.0
    %258 = vmatpush1.msra.mxu0 0.0
    %259 = vmatprep.subr.mxu0 0.0
    %260 = vmatpush1.msra.mxu0 0.0
    %261 = vmatprep.subr.mxu0 0.0
    %262 = vmatpush1.msra.mxu0 0.0
    %263 = vmatprep.subr.mxu0 0.0
    %264 = vmatpush1.msra.mxu0 0.0
    %265 = vmatprep.subr.mxu0 0.0
    %266 = vmatpush1.msra.mxu0 0.0
    %267 = vmatprep.subr.mxu0 0.0
    %268 = vmatpush1.msra.mxu0 0.0
    %269 = vmatprep.subr.mxu0 0.0
    %270 = vmatpush1.msra.mxu0 0.0
    %271 = vmatprep.mubr.f32.mxu0 0.0
    %272 = vmatmul.mubr.f32.gmra.mrb[0].mxu0 %v205
    %v273 = vpop.f32.mrb[0].mxu0
    %v274 = vadd.f32 0.0, %v273
    %v275 = vpop.f32.mrb[0].mxu0
    %276 = vdwg.mxu0
    %v277 = vadd.f32 %v195, %v274
    %v278 = vxor.u32 %v277, 2147483648
    %v279 = vmul.f32 %v278, 1.442695
    %v280 = vpow.pop %v279
    %v281 = vadd.f32 %v280, 1.0
    %v282 = vrcp.pop %v281
    %v283 = vmul.f32 1.0, %v282
    %v284 = vtanh.pop %v277
    %v285 = vmul.f32 %v283, 0.0
    %287 = vrot.lane.b32.xlu0 %v284, 64
    %v288 = vpop.permute.xlu0 %287
    %v290 = vmul.f32 %v283, %v288
    %292 = vrot.lane.b32.xlu0 %v290, 32
    %v293 = vpop.permute.xlu0 %292
    %v295 = vadd.f32 %v285, %v293
    %v296 = vtanh.pop %v295
    %298 = vrot.lane.b32.xlu0 %v296, 64
    %v299 = vpop.permute.xlu0 %298
    %v301 = vmul.f32 %v283, %v299
    %303 = vrot.lane.b32.xlu0 %v301, 32
    %v304 = vpop.permute.xlu0 %303
    %v305 = vsel %vm203, %v304, 0
    %307 = vmatprep.subr.mxu0 0.0
    %308 = vmatpush1.msra.mxu0 %v111
    %309 = vmatprep.subr.mxu0 0.0
    %310 = vmatpush1.msra.mxu0 %v112
    %311 = vmatprep.subr.mxu0 0.0
    %312 = vmatpush1.msra.mxu0 %v113
    %313 = vmatprep.subr.mxu0 0.0
    %314 = vmatpush1.msra.mxu0 %v114
    %315 = vmatprep.subr.mxu0 0.0
    %316 = vmatpush1.msra.mxu0 0.0
    %317 = vmatprep.subr.mxu0 0.0
    %318 = vmatpush1.msra.mxu0 0.0
    %319 = vmatprep.subr.mxu0 0.0
    %320 = vmatpush1.msra.mxu0 0.0
    %321 = vmatprep.subr.mxu0 0.0
    %322 = vmatpush1.msra.mxu0 0.0
    %323 = vmatprep.subr.mxu0 0.0
    %324 = vmatpush1.msra.mxu0 0.0
    %325 = vmatprep.subr.mxu0 0.0
    %326 = vmatpush1.msra.mxu0 0.0
    %327 = vmatprep.subr.mxu0 0.0
    %328 = vmatpush1.msra.mxu0 0.0
    %329 = vmatprep.subr.mxu0 0.0
    %330 = vmatpush1.msra.mxu0 0.0
    %331 = vmatprep.subr.mxu0 0.0
    %332 = vmatpush1.msra.mxu0 0.0
    %333 = vmatprep.subr.mxu0 0.0
    %334 = vmatpush1.msra.mxu0 0.0
    %335 = vmatprep.subr.mxu0 0.0
    %336 = vmatpush1.msra.mxu0 0.0
    %337 = vmatprep.subr.mxu0 0.0
    %338 = vmatpush1.msra.mxu0 0.0
    %339 = vmatprep.subr.mxu0 0.0
    %340 = vmatpush1.msra.mxu0 0.0
    %341 = vmatprep.subr.mxu0 0.0
    %342 = vmatpush1.msra.mxu0 0.0
    %343 = vmatprep.subr.mxu0 0.0
    %344 = vmatpush1.msra.mxu0 0.0
    %345 = vmatprep.subr.mxu0 0.0
    %346 = vmatpush1.msra.mxu0 0.0
    %347 = vmatprep.subr.mxu0 0.0
    %348 = vmatpush1.msra.mxu0 0.0
    %349 = vmatprep.subr.mxu0 0.0
    %350 = vmatpush1.msra.mxu0 0.0
    %351 = vmatprep.subr.mxu0 0.0
    %352 = vmatpush1.msra.mxu0 0.0
    %353 = vmatprep.subr.mxu0 0.0
    %354 = vmatpush1.msra.mxu0 0.0
    %355 = vmatprep.subr.mxu0 0.0
    %356 = vmatpush1.msra.mxu0 0.0
    %357 = vmatprep.subr.mxu0 0.0
    %358 = vmatpush1.msra.mxu0 0.0
    %359 = vmatprep.subr.mxu0 0.0
    %360 = vmatpush1.msra.mxu0 0.0
    %361 = vmatprep.subr.mxu0 0.0
    %362 = vmatpush1.msra.mxu0 0.0
    %363 = vmatprep.subr.mxu0 0.0
    %364 = vmatpush1.msra.mxu0 0.0
    %365 = vmatprep.subr.mxu0 0.0
    %366 = vmatpush1.msra.mxu0 0.0
    %367 = vmatprep.subr.mxu0 0.0
    %368 = vmatpush1.msra.mxu0 0.0
    %369 = vmatprep.subr.mxu0 0.0
    %370 = vmatpush1.msra.mxu0 0.0
    %371 = vmatprep.mubr.f32.mxu0 0.0
    %372 = vmatmul.mubr.f32.gmra.mrb[0].mxu0 %v305
    %v373 = vpop.f32.mrb[0].mxu0
    %v374 = vadd.f32 0.0, %v373
    %v375 = vpop.f32.mrb[0].mxu0
    %376 = vdwg.mxu0
    %v378 = vrot.slane %v374, 6
    %v380 = vadd.f32 %v195, %v378
    %v381 = vxor.u32 %v380, 2147483648
    %v382 = vmul.f32 %v381, 1.442695
    %v383 = vpow.pop %v382
    %v384 = vadd.f32 %v383, 1.0
    %v385 = vrcp.pop %v384
    %v386 = vmul.f32 1.0, %v385
    %v387 = vtanh.pop %v380
    %v389 = vrot.slane %v295, 6
    %v391 = vmul.f32 %v386, %v389
    %393 = vrot.lane.b32.xlu0 %v387, 64
    %v394 = vpop.permute.xlu0 %393
    %v396 = vmul.f32 %v386, %v394
    %398 = vrot.lane.b32.xlu0 %v396, 32
    %v399 = vpop.permute.xlu0 %398
    %v401 = vadd.f32 %v391, %v399
    %v402 = vtanh.pop %v401
    %404 = vrot.lane.b32.xlu0 %v402, 64
    %v405 = vpop.permute.xlu0 %404
    %v407 = vmul.f32 %v386, %v405
    %v409 = vrot.slane %v407, 2
    %410 = vrot.lane.b32.xlu0 %v409, 32
    %v411 = vpop.permute.xlu0 %410
    %v412 = vsel %vm203, %v411, 0
    %414 = vmatprep.subr.mxu0 0.0
    %415 = vmatpush1.msra.mxu0 %v111
    %416 = vmatprep.subr.mxu0 0.0
    %417 = vmatpush1.msra.mxu0 %v112
    %418 = vmatprep.subr.mxu0 0.0
    %419 = vmatpush1.msra.mxu0 %v113
    %420 = vmatprep.subr.mxu0 0.0
    %421 = vmatpush1.msra.mxu0 %v114
    %422 = vmatprep.subr.mxu0 0.0
    %423 = vmatpush1.msra.mxu0 0.0
    %424 = vmatprep.subr.mxu0 0.0
    %425 = vmatpush1.msra.mxu0 0.0
    %426 = vmatprep.subr.mxu0 0.0
    %427 = vmatpush1.msra.mxu0 0.0
    %428 = vmatprep.subr.mxu0 0.0
    %429 = vmatpush1.msra.mxu0 0.0
    %430 = vmatprep.subr.mxu0 0.0
    %431 = vmatpush1.msra.mxu0 0.0
    %432 = vmatprep.subr.mxu0 0.0
    %433 = vmatpush1.msra.mxu0 0.0
    %434 = vmatprep.subr.mxu0 0.0
    %435 = vmatpush1.msra.mxu0 0.0
    %436 = vmatprep.subr.mxu0 0.0
    %437 = vmatpush1.msra.mxu0 0.0
    %438 = vmatprep.subr.mxu0 0.0
    %439 = vmatpush1.msra.mxu0 0.0
    %440 = vmatprep.subr.mxu0 0.0
    %441 = vmatpush1.msra.mxu0 0.0
    %442 = vmatprep.subr.mxu0 0.0
    %443 = vmatpush1.msra.mxu0 0.0
    %444 = vmatprep.subr.mxu0 0.0
    %445 = vmatpush1.msra.mxu0 0.0
    %446 = vmatprep.subr.mxu0 0.0
    %447 = vmatpush1.msra.mxu0 0.0
    %448 = vmatprep.subr.mxu0 0.0
    %449 = vmatpush1.msra.mxu0 0.0
    %450 = vmatprep.subr.mxu0 0.0
    %451 = vmatpush1.msra.mxu0 0.0
    %452 = vmatprep.subr.mxu0 0.0
    %453 = vmatpush1.msra.mxu0 0.0
    %454 = vmatprep.subr.mxu0 0.0
    %455 = vmatpush1.msra.mxu0 0.0
    %456 = vmatprep.subr.mxu0 0.0
    %457 = vmatpush1.msra.mxu0 0.0
    %458 = vmatprep.subr.mxu0 0.0
    %459 = vmatpush1.msra.mxu0 0.0
    %460 = vmatprep.subr.mxu0 0.0
    %461 = vmatpush1.msra.mxu0 0.0
    %462 = vmatprep.subr.mxu0 0.0
    %463 = vmatpush1.msra.mxu0 0.0
    %464 = vmatprep.subr.mxu0 0.0
    %465 = vmatpush1.msra.mxu0 0.0
    %466 = vmatprep.subr.mxu0 0.0
    %467 = vmatpush1.msra.mxu0 0.0
    %468 = vmatprep.subr.mxu0 0.0
    %469 = vmatpush1.msra.mxu0 0.0
    %470 = vmatprep.subr.mxu0 0.0
    %471 = vmatpush1.msra.mxu0 0.0
    %472 = vmatprep.subr.mxu0 0.0
    %473 = vmatpush1.msra.mxu0 0.0
    %474 = vmatprep.subr.mxu0 0.0
    %475 = vmatpush1.msra.mxu0 0.0
    %476 = vmatprep.subr.mxu0 0.0
    %477 = vmatpush1.msra.mxu0 0.0
    %478 = vmatprep.mubr.f32.mxu0 0.0
    %479 = vmatmul.mubr.f32.gmra.mrb[0].mxu0 %v412
    %v480 = vpop.f32.mrb[0].mxu0
    %v481 = vadd.f32 0.0, %v480
    %v482 = vpop.f32.mrb[0].mxu0
    %483 = vdwg.mxu0
    %v485 = vrot.slane %v481, 4
    %v487 = vadd.f32 %v195, %v485
    %v488 = vxor.u32 %v487, 2147483648
    %v489 = vmul.f32 %v488, 1.442695
    %v490 = vpow.pop %v489
    %v491 = vadd.f32 %v490, 1.0
    %v492 = vrcp.pop %v491
    %v493 = vmul.f32 1.0, %v492
    %v494 = vtanh.pop %v487
    %v496 = vrot.slane %v401, 6
    %v498 = vmul.f32 %v493, %v496
    %500 = vrot.lane.b32.xlu0 %v494, 64
    %v501 = vpop.permute.xlu0 %500
    %v503 = vmul.f32 %v493, %v501
    %505 = vrot.lane.b32.xlu0 %v503, 32
    %v506 = vpop.permute.xlu0 %505
    %v508 = vadd.f32 %v498, %v506
    %v509 = vtanh.pop %v508
    %511 = vrot.lane.b32.xlu0 %v509, 64
    %v512 = vpop.permute.xlu0 %511
    %v514 = vmul.f32 %v493, %v512
    %v516 = vrot.slane %v514, 4
    %517 = vrot.lane.b32.xlu0 %v516, 32
    %v518 = vpop.permute.xlu0 %517
    %v519 = vsel %vm203, %v518, 0
    %521 = vmatprep.subr.mxu0 0.0
    %522 = vmatpush1.msra.mxu0 %v111
    %523 = vmatprep.subr.mxu0 0.0
    %524 = vmatpush1.msra.mxu0 %v112
    %525 = vmatprep.subr.mxu0 0.0
    %526 = vmatpush1.msra.mxu0 %v113
    %527 = vmatprep.subr.mxu0 0.0
    %528 = vmatpush1.msra.mxu0 %v114
    %529 = vmatprep.subr.mxu0 0.0
    %530 = vmatpush1.msra.mxu0 0.0
    %531 = vmatprep.subr.mxu0 0.0
    %532 = vmatpush1.msra.mxu0 0.0
    %533 = vmatprep.subr.mxu0 0.0
    %534 = vmatpush1.msra.mxu0 0.0
    %535 = vmatprep.subr.mxu0 0.0
    %536 = vmatpush1.msra.mxu0 0.0
    %537 = vmatprep.subr.mxu0 0.0
    %538 = vmatpush1.msra.mxu0 0.0
    %539 = vmatprep.subr.mxu0 0.0
    %540 = vmatpush1.msra.mxu0 0.0
    %541 = vmatprep.subr.mxu0 0.0
    %542 = vmatpush1.msra.mxu0 0.0
    %543 = vmatprep.subr.mxu0 0.0
    %544 = vmatpush1.msra.mxu0 0.0
    %545 = vmatprep.subr.mxu0 0.0
    %546 = vmatpush1.msra.mxu0 0.0
    %547 = vmatprep.subr.mxu0 0.0
    %548 = vmatpush1.msra.mxu0 0.0
    %549 = vmatprep.subr.mxu0 0.0
    %550 = vmatpush1.msra.mxu0 0.0
    %551 = vmatprep.subr.mxu0 0.0
    %552 = vmatpush1.msra.mxu0 0.0
    %553 = vmatprep.subr.mxu0 0.0
    %554 = vmatpush1.msra.mxu0 0.0
    %555 = vmatprep.subr.mxu0 0.0
    %556 = vmatpush1.msra.mxu0 0.0
    %557 = vmatprep.subr.mxu0 0.0
    %558 = vmatpush1.msra.mxu0 0.0
    %559 = vmatprep.subr.mxu0 0.0
    %560 = vmatpush1.msra.mxu0 0.0
    %561 = vmatprep.subr.mxu0 0.0
    %562 = vmatpush1.msra.mxu0 0.0
    %563 = vmatprep.subr.mxu0 0.0
    %564 = vmatpush1.msra.mxu0 0.0
    %565 = vmatprep.subr.mxu0 0.0
    %566 = vmatpush1.msra.mxu0 0.0
    %567 = vmatprep.subr.mxu0 0.0
    %568 = vmatpush1.msra.mxu0 0.0
    %569 = vmatprep.subr.mxu0 0.0
    %570 = vmatpush1.msra.mxu0 0.0
    %571 = vmatprep.subr.mxu0 0.0
    %572 = vmatpush1.msra.mxu0 0.0
    %573 = vmatprep.subr.mxu0 0.0
    %574 = vmatpush1.msra.mxu0 0.0
    %575 = vmatprep.subr.mxu0 0.0
    %576 = vmatpush1.msra.mxu0 0.0
    %577 = vmatprep.subr.mxu0 0.0
    %578 = vmatpush1.msra.mxu0 0.0
    %579 = vmatprep.subr.mxu0 0.0
    %580 = vmatpush1.msra.mxu0 0.0
    %581 = vmatprep.subr.mxu0 0.0
    %582 = vmatpush1.msra.mxu0 0.0
    %583 = vmatprep.subr.mxu0 0.0
    %584 = vmatpush1.msra.mxu0 0.0
    %585 = vmatprep.mubr.f32.mxu0 0.0
    %586 = vmatmul.mubr.f32.gmra.mrb[0].mxu0 %v519
    %v587 = vpop.f32.mrb[0].mxu0
    %v588 = vadd.f32 0.0, %v587
    %v589 = vpop.f32.mrb[0].mxu0
    %590 = vdwg.mxu0
    %v592 = vrot.slane %v588, 2
    %v594 = vadd.f32 %v195, %v592
    %v595 = vxor.u32 %v594, 2147483648
    %v596 = vmul.f32 %v595, 1.442695
    %v597 = vpow.pop %v596
    %v598 = vadd.f32 %v597, 1.0
    %v599 = vrcp.pop %v598
    %v600 = vmul.f32 1.0, %v599
    %v601 = vtanh.pop %v594
    %v603 = vrot.slane %v508, 6
    %v605 = vmul.f32 %v600, %v603
    %607 = vrot.lane.b32.xlu0 %v601, 64
    %v608 = vpop.permute.xlu0 %607
    %v610 = vmul.f32 %v600, %v608
    %612 = vrot.lane.b32.xlu0 %v610, 32
    %v613 = vpop.permute.xlu0 %612
    %v615 = vadd.f32 %v605, %v613
    %v616 = vtanh.pop %v615
    %618 = vrot.lane.b32.xlu0 %v616, 64
    %v619 = vpop.permute.xlu0 %618
    %v621 = vmul.f32 %v600, %v619
    %v623 = vrot.slane %v621, 6
    %624 = vrot.lane.b32.xlu0 %v623, 32
    %v625 = vpop.permute.xlu0 %624
    %v626 = vsel %vm203, %v625, 0
    %628 = vmatprep.subr.mxu0 0.0
    %629 = vmatpush1.msra.mxu0 %v111
    %630 = vmatprep.subr.mxu0 0.0
    %631 = vmatpush1.msra.mxu0 %v112
    %632 = vmatprep.subr.mxu0 0.0
    %633 = vmatpush1.msra.mxu0 %v113
    %634 = vmatprep.subr.mxu0 0.0
    %635 = vmatpush1.msra.mxu0 %v114
    %636 = vmatprep.subr.mxu0 0.0
    %637 = vmatpush1.msra.mxu0 0.0
    %638 = vmatprep.subr.mxu0 0.0
    %639 = vmatpush1.msra.mxu0 0.0
    %640 = vmatprep.subr.mxu0 0.0
    %641 = vmatpush1.msra.mxu0 0.0
    %642 = vmatprep.subr.mxu0 0.0
    %643 = vmatpush1.msra.mxu0 0.0
    %644 = vmatprep.subr.mxu0 0.0
    %645 = vmatpush1.msra.mxu0 0.0
    %646 = vmatprep.subr.mxu0 0.0
    %647 = vmatpush1.msra.mxu0 0.0
    %648 = vmatprep.subr.mxu0 0.0
    %649 = vmatpush1.msra.mxu0 0.0
    %650 = vmatprep.subr.mxu0 0.0
    %651 = vmatpush1.msra.mxu0 0.0
    %652 = vmatprep.subr.mxu0 0.0
    %653 = vmatpush1.msra.mxu0 0.0
    %654 = vmatprep.subr.mxu0 0.0
    %655 = vmatpush1.msra.mxu0 0.0
    %656 = vmatprep.subr.mxu0 0.0
    %657 = vmatpush1.msra.mxu0 0.0
    %658 = vmatprep.subr.mxu0 0.0
    %659 = vmatpush1.msra.mxu0 0.0
    %660 = vmatprep.subr.mxu0 0.0
    %661 = vmatpush1.msra.mxu0 0.0
    %662 = vmatprep.subr.mxu0 0.0
    %663 = vmatpush1.msra.mxu0 0.0
    %664 = vmatprep.subr.mxu0 0.0
    %665 = vmatpush1.msra.mxu0 0.0
    %666 = vmatprep.subr.mxu0 0.0
    %667 = vmatpush1.msra.mxu0 0.0
    %668 = vmatprep.subr.mxu0 0.0
    %669 = vmatpush1.msra.mxu0 0.0
    %670 = vmatprep.subr.mxu0 0.0
    %671 = vmatpush1.msra.mxu0 0.0
    %672 = vmatprep.subr.mxu0 0.0
    %673 = vmatpush1.msra.mxu0 0.0
    %674 = vmatprep.subr.mxu0 0.0
    %675 = vmatpush1.msra.mxu0 0.0
    %676 = vmatprep.subr.mxu0 0.0
    %677 = vmatpush1.msra.mxu0 0.0
    %678 = vmatprep.subr.mxu0 0.0
    %679 = vmatpush1.msra.mxu0 0.0
    %680 = vmatprep.subr.mxu0 0.0
    %681 = vmatpush1.msra.mxu0 0.0
    %682 = vmatprep.subr.mxu0 0.0
    %683 = vmatpush1.msra.mxu0 0.0
    %684 = vmatprep.subr.mxu0 0.0
    %685 = vmatpush1.msra.mxu0 0.0
    %686 = vmatprep.subr.mxu0 0.0
    %687 = vmatpush1.msra.mxu0 0.0
    %688 = vmatprep.subr.mxu0 0.0
    %689 = vmatpush1.msra.mxu0 0.0
    %690 = vmatprep.subr.mxu0 0.0
    %691 = vmatpush1.msra.mxu0 0.0
    %692 = vmatprep.mubr.f32.mxu0 0.0
    %693 = vmatmul.mubr.f32.gmra.mrb[0].mxu0 %v626
    %v694 = vpop.f32.mrb[0].mxu0
    %v695 = vadd.f32 0.0, %v694
    %v696 = vpop.f32.mrb[0].mxu0
    %697 = vdwg.mxu0
    %v698 = vadd.f32 %v200, %v695
    %v699 = vxor.u32 %v698, 2147483648
    %v700 = vmul.f32 %v699, 1.442695
    %v701 = vpow.pop %v700
    %v702 = vadd.f32 %v701, 1.0
    %v703 = vrcp.pop %v702
    %v704 = vmul.f32 1.0, %v703
    %v705 = vtanh.pop %v698
    %v707 = vrot.slane %v615, 6
    %v709 = vmul.f32 %v704, %v707
    %711 = vrot.lane.b32.xlu0 %v705, 64
    %v712 = vpop.permute.xlu0 %711
    %v714 = vmul.f32 %v704, %v712
    %716 = vrot.lane.b32.xlu0 %v714, 32
    %v717 = vpop.permute.xlu0 %716
    %v719 = vadd.f32 %v709, %v717
    %v720 = vtanh.pop %v719
    %722 = vrot.lane.b32.xlu0 %v720, 64
    %v723 = vpop.permute.xlu0 %722
    %v725 = vmul.f32 %v704, %v723
    %727 = vrot.lane.b32.xlu0 %v725, 32
    %v728 = vpop.permute.xlu0 %727
    %v729 = vsel %vm203, %v728, 0
    %731 = vmatprep.subr.mxu0 0.0
    %732 = vmatpush1.msra.mxu0 %v111
    %733 = vmatprep.subr.mxu0 0.0
    %734 = vmatpush1.msra.mxu0 %v112
    %735 = vmatprep.subr.mxu0 0.0
    %736 = vmatpush1.msra.mxu0 %v113
    %737 = vmatprep.subr.mxu0 0.0
    %738 = vmatpush1.msra.mxu0 %v114
    %739 = vmatprep.subr.mxu0 0.0
    %740 = vmatpush1.msra.mxu0 0.0
    %741 = vmatprep.subr.mxu0 0.0
    %742 = vmatpush1.msra.mxu0 0.0
    %743 = vmatprep.subr.mxu0 0.0
    %744 = vmatpush1.msra.mxu0 0.0
    %745 = vmatprep.subr.mxu0 0.0
    %746 = vmatpush1.msra.mxu0 0.0
    %747 = vmatprep.subr.mxu0 0.0
    %748 = vmatpush1.msra.mxu0 0.0
    %749 = vmatprep.subr.mxu0 0.0
    %750 = vmatpush1.msra.mxu0 0.0
    %751 = vmatprep.subr.mxu0 0.0
    %752 = vmatpush1.msra.mxu0 0.0
    %753 = vmatprep.subr.mxu0 0.0
    %754 = vmatpush1.msra.mxu0 0.0
    %755 = vmatprep.subr.mxu0 0.0
    %756 = vmatpush1.msra.mxu0 0.0
    %757 = vmatprep.subr.mxu0 0.0
    %758 = vmatpush1.msra.mxu0 0.0
    %759 = vmatprep.subr.mxu0 0.0
    %760 = vmatpush1.msra.mxu0 0.0
    %761 = vmatprep.subr.mxu0 0.0
    %762 = vmatpush1.msra.mxu0 0.0
    %763 = vmatprep.subr.mxu0 0.0
    %764 = vmatpush1.msra.mxu0 0.0
    %765 = vmatprep.subr.mxu0 0.0
    %766 = vmatpush1.msra.mxu0 0.0
    %767 = vmatprep.subr.mxu0 0.0
    %768 = vmatpush1.msra.mxu0 0.0
    %769 = vmatprep.subr.mxu0 0.0
    %770 = vmatpush1.msra.mxu0 0.0
    %771 = vmatprep.subr.mxu0 0.0
    %772 = vmatpush1.msra.mxu0 0.0
    %773 = vmatprep.subr.mxu0 0.0
    %774 = vmatpush1.msra.mxu0 0.0
    %775 = vmatprep.subr.mxu0 0.0
    %776 = vmatpush1.msra.mxu0 0.0
    %777 = vmatprep.subr.mxu0 0.0
    %778 = vmatpush1.msra.mxu0 0.0
    %779 = vmatprep.subr.mxu0 0.0
    %780 = vmatpush1.msra.mxu0 0.0
    %781 = vmatprep.subr.mxu0 0.0
    %782 = vmatpush1.msra.mxu0 0.0
    %783 = vmatprep.subr.mxu0 0.0
    %784 = vmatpush1.msra.mxu0 0.0
    %785 = vmatprep.subr.mxu0 0.0
    %786 = vmatpush1.msra.mxu0 0.0
    %787 = vmatprep.subr.mxu0 0.0
    %788 = vmatpush1.msra.mxu0 0.0
    %789 = vmatprep.subr.mxu0 0.0
    %790 = vmatpush1.msra.mxu0 0.0
    %791 = vmatprep.subr.mxu0 0.0
    %792 = vmatpush1.msra.mxu0 0.0
    %793 = vmatprep.subr.mxu0 0.0
    %794 = vmatpush1.msra.mxu0 0.0
    %795 = vmatprep.mubr.f32.mxu0 0.0
    %796 = vmatmul.mubr.f32.gmra.mrb[0].mxu0 %v729
    %v797 = vpop.f32.mrb[0].mxu0
    %v798 = vadd.f32 0.0, %v797
    %v799 = vpop.f32.mrb[0].mxu0
    %800 = vdwg.mxu0
    %v802 = vrot.slane %v798, 6
    %v804 = vadd.f32 %v200, %v802
    %v805 = vxor.u32 %v804, 2147483648
    %v806 = vmul.f32 %v805, 1.442695
    %v807 = vpow.pop %v806
    %v808 = vadd.f32 %v807, 1.0
    %v809 = vrcp.pop %v808
    %v810 = vmul.f32 1.0, %v809
    %v811 = vtanh.pop %v804
    %v813 = vrot.slane %v719, 6
    %v815 = vmul.f32 %v810, %v813
    %817 = vrot.lane.b32.xlu0 %v811, 64
    %v818 = vpop.permute.xlu0 %817
    %v820 = vmul.f32 %v810, %v818
    %822 = vrot.lane.b32.xlu0 %v820, 32
    %v823 = vpop.permute.xlu0 %822
    %v825 = vadd.f32 %v815, %v823
    %v826 = vtanh.pop %v825
    %828 = vrot.lane.b32.xlu0 %v826, 64
    %v829 = vpop.permute.xlu0 %828
    %v831 = vmul.f32 %v810, %v829
    %v833 = vrot.slane %v831, 2
    %834 = vrot.lane.b32.xlu0 %v833, 32
    %v835 = vpop.permute.xlu0 %834
    %v836 = vsel %vm203, %v835, 0
    %838 = vmatprep.subr.mxu0 0.0
    %839 = vmatpush1.msra.mxu0 %v111
    %840 = vmatprep.subr.mxu0 0.0
    %841 = vmatpush1.msra.mxu0 %v112
    %842 = vmatprep.subr.mxu0 0.0
    %843 = vmatpush1.msra.mxu0 %v113
    %844 = vmatprep.subr.mxu0 0.0
    %845 = vmatpush1.msra.mxu0 %v114
    %846 = vmatprep.subr.mxu0 0.0
    %847 = vmatpush1.msra.mxu0 0.0
    %848 = vmatprep.subr.mxu0 0.0
    %849 = vmatpush1.msra.mxu0 0.0
    %850 = vmatprep.subr.mxu0 0.0
    %851 = vmatpush1.msra.mxu0 0.0
    %852 = vmatprep.subr.mxu0 0.0
    %853 = vmatpush1.msra.mxu0 0.0
    %854 = vmatprep.subr.mxu0 0.0
    %855 = vmatpush1.msra.mxu0 0.0
    %856 = vmatprep.subr.mxu0 0.0
    %857 = vmatpush1.msra.mxu0 0.0
    %858 = vmatprep.subr.mxu0 0.0
    %859 = vmatpush1.msra.mxu0 0.0
    %860 = vmatprep.subr.mxu0 0.0
    %861 = vmatpush1.msra.mxu0 0.0
    %862 = vmatprep.subr.mxu0 0.0
    %863 = vmatpush1.msra.mxu0 0.0
    %864 = vmatprep.subr.mxu0 0.0
    %865 = vmatpush1.msra.mxu0 0.0
    %866 = vmatprep.subr.mxu0 0.0
    %867 = vmatpush1.msra.mxu0 0.0
    %868 = vmatprep.subr.mxu0 0.0
    %869 = vmatpush1.msra.mxu0 0.0
    %870 = vmatprep.subr.mxu0 0.0
    %871 = vmatpush1.msra.mxu0 0.0
    %872 = vmatprep.subr.mxu0 0.0
    %873 = vmatpush1.msra.mxu0 0.0
    %874 = vmatprep.subr.mxu0 0.0
    %875 = vmatpush1.msra.mxu0 0.0
    %876 = vmatprep.subr.mxu0 0.0
    %877 = vmatpush1.msra.mxu0 0.0
    %878 = vmatprep.subr.mxu0 0.0
    %879 = vmatpush1.msra.mxu0 0.0
    %880 = vmatprep.subr.mxu0 0.0
    %881 = vmatpush1.msra.mxu0 0.0
    %882 = vmatprep.subr.mxu0 0.0
    %883 = vmatpush1.msra.mxu0 0.0
    %884 = vmatprep.subr.mxu0 0.0
    %885 = vmatpush1.msra.mxu0 0.0
    %886 = vmatprep.subr.mxu0 0.0
    %887 = vmatpush1.msra.mxu0 0.0
    %888 = vmatprep.subr.mxu0 0.0
    %889 = vmatpush1.msra.mxu0 0.0
    %890 = vmatprep.subr.mxu0 0.0
    %891 = vmatpush1.msra.mxu0 0.0
    %892 = vmatprep.subr.mxu0 0.0
    %893 = vmatpush1.msra.mxu0 0.0
    %894 = vmatprep.subr.mxu0 0.0
    %895 = vmatpush1.msra.mxu0 0.0
    %896 = vmatprep.subr.mxu0 0.0
    %897 = vmatpush1.msra.mxu0 0.0
    %898 = vmatprep.subr.mxu0 0.0
    %899 = vmatpush1.msra.mxu0 0.0
    %900 = vmatprep.subr.mxu0 0.0
    %901 = vmatpush1.msra.mxu0 0.0
    %902 = vmatprep.mubr.f32.mxu0 0.0
    %903 = vmatmul.mubr.f32.gmra.mrb[0].mxu0 %v836
    %v904 = vpop.f32.mrb[0].mxu0
    %v905 = vadd.f32 0.0, %v904
    %v906 = vpop.f32.mrb[0].mxu0
    %907 = vdwg.mxu0
    %v909 = vrot.slane %v905, 4
    %v911 = vadd.f32 %v200, %v909
    %v912 = vxor.u32 %v911, 2147483648
    %v913 = vmul.f32 %v912, 1.442695
    %v914 = vpow.pop %v913
    %v915 = vadd.f32 %v914, 1.0
    %v916 = vrcp.pop %v915
    %v917 = vmul.f32 1.0, %v916
    %v918 = vtanh.pop %v911
    %v920 = vrot.slane %v825, 6
    %v922 = vmul.f32 %v917, %v920
    %924 = vrot.lane.b32.xlu0 %v918, 64
    %v925 = vpop.permute.xlu0 %924
    %v927 = vmul.f32 %v917, %v925
    %929 = vrot.lane.b32.xlu0 %v927, 32
    %v930 = vpop.permute.xlu0 %929
    %v932 = vadd.f32 %v922, %v930
    %v933 = vtanh.pop %v932
    %935 = vrot.lane.b32.xlu0 %v933, 64
    %v936 = vpop.permute.xlu0 %935
    %v938 = vmul.f32 %v917, %v936
    %v940 = vrot.slane %v938, 4
    %941 = vrot.lane.b32.xlu0 %v940, 32
    %v942 = vpop.permute.xlu0 %941
    %v943 = vsel %vm203, %v942, 0
    %945 = vmatprep.subr.mxu0 0.0
    %946 = vmatpush1.msra.mxu0 %v111
    %947 = vmatprep.subr.mxu0 0.0
    %948 = vmatpush1.msra.mxu0 %v112
    %949 = vmatprep.subr.mxu0 0.0
    %950 = vmatpush1.msra.mxu0 %v113
    %951 = vmatprep.subr.mxu0 0.0
    %952 = vmatpush1.msra.mxu0 %v114
    %953 = vmatprep.subr.mxu0 0.0
    %954 = vmatpush1.msra.mxu0 0.0
    %955 = vmatprep.subr.mxu0 0.0
    %956 = vmatpush1.msra.mxu0 0.0
    %957 = vmatprep.subr.mxu0 0.0
    %958 = vmatpush1.msra.mxu0 0.0
    %959 = vmatprep.subr.mxu0 0.0
    %960 = vmatpush1.msra.mxu0 0.0
    %961 = vmatprep.subr.mxu0 0.0
    %962 = vmatpush1.msra.mxu0 0.0
    %963 = vmatprep.subr.mxu0 0.0
    %964 = vmatpush1.msra.mxu0 0.0
    %965 = vmatprep.subr.mxu0 0.0
    %966 = vmatpush1.msra.mxu0 0.0
    %967 = vmatprep.subr.mxu0 0.0
    %968 = vmatpush1.msra.mxu0 0.0
    %969 = vmatprep.subr.mxu0 0.0
    %970 = vmatpush1.msra.mxu0 0.0
    %971 = vmatprep.subr.mxu0 0.0
    %972 = vmatpush1.msra.mxu0 0.0
    %973 = vmatprep.subr.mxu0 0.0
    %974 = vmatpush1.msra.mxu0 0.0
    %975 = vmatprep.subr.mxu0 0.0
    %976 = vmatpush1.msra.mxu0 0.0
    %977 = vmatprep.subr.mxu0 0.0
    %978 = vmatpush1.msra.mxu0 0.0
    %979 = vmatprep.subr.mxu0 0.0
    %980 = vmatpush1.msra.mxu0 0.0
    %981 = vmatprep.subr.mxu0 0.0
    %982 = vmatpush1.msra.mxu0 0.0
    %983 = vmatprep.subr.mxu0 0.0
    %984 = vmatpush1.msra.mxu0 0.0
    %985 = vmatprep.subr.mxu0 0.0
    %986 = vmatpush1.msra.mxu0 0.0
    %987 = vmatprep.subr.mxu0 0.0
    %988 = vmatpush1.msra.mxu0 0.0
    %989 = vmatprep.subr.mxu0 0.0
    %990 = vmatpush1.msra.mxu0 0.0
    %991 = vmatprep.subr.mxu0 0.0
    %992 = vmatpush1.msra.mxu0 0.0
    %993 = vmatprep.subr.mxu0 0.0
    %994 = vmatpush1.msra.mxu0 0.0
    %995 = vmatprep.subr.mxu0 0.0
    %996 = vmatpush1.msra.mxu0 0.0
    %997 = vmatprep.subr.mxu0 0.0
    %998 = vmatpush1.msra.mxu0 0.0
    %999 = vmatprep.subr.mxu0 0.0
    %1000 = vmatpush1.msra.mxu0 0.0
    %1001 = vmatprep.subr.mxu0 0.0
    %1002 = vmatpush1.msra.mxu0 0.0
    %1003 = vmatprep.subr.mxu0 0.0
    %1004 = vmatpush1.msra.mxu0 0.0
    %1005 = vmatprep.subr.mxu0 0.0
    %1006 = vmatpush1.msra.mxu0 0.0
    %1007 = vmatprep.subr.mxu0 0.0
    %1008 = vmatpush1.msra.mxu0 0.0
    %1009 = vmatprep.mubr.f32.mxu0 0.0
    %1010 = vmatmul.mubr.f32.gmra.mrb[0].mxu0 %v943
    %v1011 = vpop.f32.mrb[0].mxu0
    %v1012 = vadd.f32 0.0, %v1011
    %v1013 = vpop.f32.mrb[0].mxu0
    %1014 = vdwg.mxu0
    %v1016 = vrot.slane %v1012, 2
    %v1018 = vadd.f32 %v200, %v1016
    %v1019 = vxor.u32 %v1018, 2147483648
    %v1020 = vmul.f32 %v1019, 1.442695
    %v1021 = vpow.pop %v1020
    %v1022 = vadd.f32 %v1021, 1.0
    %v1023 = vrcp.pop %v1022
    %v1024 = vmul.f32 1.0, %v1023
    %v1025 = vtanh.pop %v1018
    %v1027 = vrot.slane %v932, 6
    %v1029 = vmul.f32 %v1024, %v1027
    %1031 = vrot.lane.b32.xlu0 %v1025, 64
    %v1032 = vpop.permute.xlu0 %1031
    %v1034 = vmul.f32 %v1024, %v1032
    %1036 = vrot.lane.b32.xlu0 %v1034, 32
    %v1037 = vpop.permute.xlu0 %1036
    %v1039 = vadd.f32 %v1029, %v1037
    %v1040 = vtanh.pop %v1039
    %1042 = vrot.lane.b32.xlu0 %v1040, 64
    %v1043 = vpop.permute.xlu0 %1042
    %v1045 = vmul.f32 %v1024, %v1043
    %vm1046 = vcmask 1041408
    %v1047 = vsel %vm1046, %v301, %v407
    %vm1048 = vcmask 1043456
    %v1049 = vsel %vm1048, %v1047, %v514
    %vm1050 = vcmask 1045504
    %v1051 = vsel %vm1050, %v1049, %v621
    %v1052 = vsel %vm1046, %v725, %v831
    %v1053 = vsel %vm1048, %v1052, %v938
    %v1054 = vsel %vm1050, %v1053, %v1045
    %v1055 = vld [vmem:[%s4] sm:$0xff]
    %v1056 = vld [vmem:[%s4 + $0x8] sm:$0xff]
    %v1057 = vld [vmem:[%s4 + $0x10] sm:$0xff]
    %v1058 = vld [vmem:[%s4 + $0x18] sm:$0xff]
    %v1059 = vld [vmem:[%s5] sm:$0x1]
    %v1060 = vld [vmem:[#allocation7] sm:$0xff]
    %v1061 = vld [vmem:[#allocation7 + $0x8] sm:$0xff]
    %v1062 = vld [vmem:[#allocation7 + $0x10] sm:$0xff]
    %v1063 = vld [vmem:[#allocation7 + $0x18] sm:$0xff]
    %v1065 = vlaneseq
    %v1066 = vshrl.u32 %v1065, 7
    %v1067 = vsub.s32 0, %v1066
    %v1068 = vrot.slane %v1059, %v1067
    %1072 = vrot.lane.b32.xlu0 %v1051, 32
    %v1073 = vpop.permute.xlu0 %1072
    %1074 = vrot.lane.b32.xlu0 %v1054, 32
    %v1075 = vpop.permute.xlu0 %1074
    %v1076 = vsel %vm203, %v1073, 0
    %v1078 = vsel %vm203, %v1075, 0
    %1080 = vmatprep.subr.mxu0 0.0
    %1081 = vmatpush1.msra.mxu0 %v1055
    %1082 = vmatprep.subr.mxu0 0.0
    %1083 = vmatpush1.msra.mxu0 %v1056
    %1084 = vmatprep.subr.mxu0 0.0
    %1085 = vmatpush1.msra.mxu0 %v1057
    %1086 = vmatprep.subr.mxu0 0.0
    %1087 = vmatpush1.msra.mxu0 %v1058
    %1088 = vmatprep.subr.mxu0 0.0
    %1089 = vmatpush1.msra.mxu0 0.0
    %1090 = vmatprep.subr.mxu0 0.0
    %1091 = vmatpush1.msra.mxu0 0.0
    %1092 = vmatprep.subr.mxu0 0.0
    %1093 = vmatpush1.msra.mxu0 0.0
    %1094 = vmatprep.subr.mxu0 0.0
    %1095 = vmatpush1.msra.mxu0 0.0
    %1096 = vmatprep.subr.mxu0 0.0
    %1097 = vmatpush1.msra.mxu0 0.0
    %1098 = vmatprep.subr.mxu0 0.0
    %1099 = vmatpush1.msra.mxu0 0.0
    %1100 = vmatprep.subr.mxu0 0.0
    %1101 = vmatpush1.msra.mxu0 0.0
    %1102 = vmatprep.subr.mxu0 0.0
    %1103 = vmatpush1.msra.mxu0 0.0
    %1104 = vmatprep.subr.mxu0 0.0
    %1105 = vmatpush1.msra.mxu0 0.0
    %1106 = vmatprep.subr.mxu0 0.0
    %1107 = vmatpush1.msra.mxu0 0.0
    %1108 = vmatprep.subr.mxu0 0.0
    %1109 = vmatpush1.msra.mxu0 0.0
    %1110 = vmatprep.subr.mxu0 0.0
    %1111 = vmatpush1.msra.mxu0 0.0
    %1112 = vmatprep.subr.mxu0 0.0
    %1113 = vmatpush1.msra.mxu0 0.0
    %1114 = vmatprep.subr.mxu0 0.0
    %1115 = vmatpush1.msra.mxu0 0.0
    %1116 = vmatprep.subr.mxu0 0.0
    %1117 = vmatpush1.msra.mxu0 0.0
    %1118 = vmatprep.subr.mxu0 0.0
    %1119 = vmatpush1.msra.mxu0 0.0
    %1120 = vmatprep.subr.mxu0 0.0
    %1121 = vmatpush1.msra.mxu0 0.0
    %1122 = vmatprep.subr.mxu0 0.0
    %1123 = vmatpush1.msra.mxu0 0.0
    %1124 = vmatprep.subr.mxu0 0.0
    %1125 = vmatpush1.msra.mxu0 0.0
    %1126 = vmatprep.subr.mxu0 0.0
    %1127 = vmatpush1.msra.mxu0 0.0
    %1128 = vmatprep.subr.mxu0 0.0
    %1129 = vmatpush1.msra.mxu0 0.0
    %1130 = vmatprep.subr.mxu0 0.0
    %1131 = vmatpush1.msra.mxu0 0.0
    %1132 = vmatprep.subr.mxu0 0.0
    %1133 = vmatpush1.msra.mxu0 0.0
    %1134 = vmatprep.subr.mxu0 0.0
    %1135 = vmatpush1.msra.mxu0 0.0
    %1136 = vmatprep.subr.mxu0 0.0
    %1137 = vmatpush1.msra.mxu0 0.0
    %1138 = vmatprep.subr.mxu0 0.0
    %1139 = vmatpush1.msra.mxu0 0.0
    %1140 = vmatprep.subr.mxu0 0.0
    %1141 = vmatpush1.msra.mxu0 0.0
    %1142 = vmatprep.subr.mxu0 0.0
    %1143 = vmatpush1.msra.mxu0 0.0
    %1144 = vmatprep.mubr.f32.mxu0 0.0
    %1145 = vmatmul.mubr.f32.gmra.mrb[0].mxu0 %v1076
    %v1146 = vpop.f32.mrb[0].mxu0
    %v1147 = vadd.f32 %v1068, %v1146
    %v1148 = vpop.f32.mrb[0].mxu0
    %1149 = vmatprep.mubr.f32.mxu0 0.0
    %1150 = vmatmul.mubr.f32.gmra.mrb[0].mxu0 %v1078
    %v1151 = vpop.f32.mrb[0].mxu0
    %v1152 = vadd.f32 %v1068, %v1151
    %v1153 = vpop.f32.mrb[0].mxu0
    %1154 = vdwg.mxu0
    %1155 = vmatprep.subr.mxu0 0.0
    %1156 = vmatpush1.msra.mxu0 %v1060
    %1157 = vmatprep.subr.mxu0 0.0
    %1158 = vmatpush1.msra.mxu0 %v1061
    %1159 = vmatprep.subr.mxu0 0.0
    %1160 = vmatpush1.msra.mxu0 %v1062
    %1161 = vmatprep.subr.mxu0 0.0
    %1162 = vmatpush1.msra.mxu0 %v1063
    %1163 = vmatprep.subr.mxu0 0.0
    %1164 = vmatpush1.msra.mxu0 0.0
    %1165 = vmatprep.subr.mxu0 0.0
    %1166 = vmatpush1.msra.mxu0 0.0
    %1167 = vmatprep.subr.mxu0 0.0
    %1168 = vmatpush1.msra.mxu0 0.0
    %1169 = vmatprep.subr.mxu0 0.0
    %1170 = vmatpush1.msra.mxu0 0.0
    %1171 = vmatprep.subr.mxu0 0.0
    %1172 = vmatpush1.msra.mxu0 0.0
    %1173 = vmatprep.subr.mxu0 0.0
    %1174 = vmatpush1.msra.mxu0 0.0
    %1175 = vmatprep.subr.mxu0 0.0
    %1176 = vmatpush1.msra.mxu0 0.0
    %1177 = vmatprep.subr.mxu0 0.0
    %1178 = vmatpush1.msra.mxu0 0.0
    %1179 = vmatprep.subr.mxu0 0.0
    %1180 = vmatpush1.msra.mxu0 0.0
    %1181 = vmatprep.subr.mxu0 0.0
    %1182 = vmatpush1.msra.mxu0 0.0
    %1183 = vmatprep.subr.mxu0 0.0
    %1184 = vmatpush1.msra.mxu0 0.0
    %1185 = vmatprep.subr.mxu0 0.0
    %1186 = vmatpush1.msra.mxu0 0.0
    %1187 = vmatprep.subr.mxu0 0.0
    %1188 = vmatpush1.msra.mxu0 0.0
    %1189 = vmatprep.subr.mxu0 0.0
    %1190 = vmatpush1.msra.mxu0 0.0
    %1191 = vmatprep.subr.mxu0 0.0
    %1192 = vmatpush1.msra.mxu0 0.0
    %1193 = vmatprep.subr.mxu0 0.0
    %1194 = vmatpush1.msra.mxu0 0.0
    %1195 = vmatprep.subr.mxu0 0.0
    %1196 = vmatpush1.msra.mxu0 0.0
    %1197 = vmatprep.subr.mxu0 0.0
    %1198 = vmatpush1.msra.mxu0 0.0
    %1199 = vmatprep.subr.mxu0 0.0
    %1200 = vmatpush1.msra.mxu0 0.0
    %1201 = vmatprep.subr.mxu0 0.0
    %1202 = vmatpush1.msra.mxu0 0.0
    %1203 = vmatprep.subr.mxu0 0.0
    %1204 = vmatpush1.msra.mxu0 0.0
    %1205 = vmatprep.subr.mxu0 0.0
    %1206 = vmatpush1.msra.mxu0 0.0
    %1207 = vmatprep.subr.mxu0 0.0
    %1208 = vmatpush1.msra.mxu0 0.0
    %1209 = vmatprep.subr.mxu0 0.0
    %1210 = vmatpush1.msra.mxu0 0.0
    %1211 = vmatprep.subr.mxu0 0.0
    %1212 = vmatpush1.msra.mxu0 0.0
    %1213 = vmatprep.subr.mxu0 0.0
    %1214 = vmatpush1.msra.mxu0 0.0
    %1215 = vmatprep.subr.mxu0 0.0
    %1216 = vmatpush1.msra.mxu0 0.0
    %1217 = vmatprep.subr.mxu0 0.0
    %1218 = vmatpush1.msra.mxu0 0.0
    %1219 = vmatprep.mubr.f32.mxu0 0.0
    %1220 = vmatmul.mubr.f32.gmra.mrb[0].mxu0 %v205
    %v1221 = vpop.f32.mrb[0].mxu0
    %v1222 = vadd.f32 0.0, %v1221
    %v1223 = vpop.f32.mrb[0].mxu0
    %1224 = vdwg.mxu0
    %v1225 = vadd.f32 %v1147, %v1222
    %v1226 = vxor.u32 %v1225, 2147483648
    %v1227 = vmul.f32 %v1226, 1.442695
    %v1228 = vpow.pop %v1227
    %v1229 = vadd.f32 %v1228, 1.0
    %v1230 = vrcp.pop %v1229
    %v1231 = vmul.f32 1.0, %v1230
    %v1232 = vtanh.pop %v1225
    %v1233 = vmul.f32 %v1231, 0.0
    %1235 = vrot.lane.b32.xlu0 %v1232, 64
    %v1236 = vpop.permute.xlu0 %1235
    %v1238 = vmul.f32 %v1231, %v1236
    %1240 = vrot.lane.b32.xlu0 %v1238, 32
    %v1241 = vpop.permute.xlu0 %1240
    %v1243 = vadd.f32 %v1233, %v1241
    %v1244 = vtanh.pop %v1243
    %1246 = vrot.lane.b32.xlu0 %v1244, 64
    %v1247 = vpop.permute.xlu0 %1246
    %v1249 = vmul.f32 %v1231, %v1247
    %1251 = vrot.lane.b32.xlu0 %v1249, 32
    %v1252 = vpop.permute.xlu0 %1251
    %v1253 = vsel %vm203, %v1252, 0
    %1255 = vmatprep.subr.mxu0 0.0
    %1256 = vmatpush1.msra.mxu0 %v1060
    %1257 = vmatprep.subr.mxu0 0.0
    %1258 = vmatpush1.msra.mxu0 %v1061
    %1259 = vmatprep.subr.mxu0 0.0
    %1260 = vmatpush1.msra.mxu0 %v1062
    %1261 = vmatprep.subr.mxu0 0.0
    %1262 = vmatpush1.msra.mxu0 %v1063
    %1263 = vmatprep.subr.mxu0 0.0
    %1264 = vmatpush1.msra.mxu0 0.0
    %1265 = vmatprep.subr.mxu0 0.0
    %1266 = vmatpush1.msra.mxu0 0.0
    %1267 = vmatprep.subr.mxu0 0.0
    %1268 = vmatpush1.msra.mxu0 0.0
    %1269 = vmatprep.subr.mxu0 0.0
    %1270 = vmatpush1.msra.mxu0 0.0
    %1271 = vmatprep.subr.mxu0 0.0
    %1272 = vmatpush1.msra.mxu0 0.0
    %1273 = vmatprep.subr.mxu0 0.0
    %1274 = vmatpush1.msra.mxu0 0.0
    %1275 = vmatprep.subr.mxu0 0.0
    %1276 = vmatpush1.msra.mxu0 0.0
    %1277 = vmatprep.subr.mxu0 0.0
    %1278 = vmatpush1.msra.mxu0 0.0
    %1279 = vmatprep.subr.mxu0 0.0
    %1280 = vmatpush1.msra.mxu0 0.0
    %1281 = vmatprep.subr.mxu0 0.0
    %1282 = vmatpush1.msra.mxu0 0.0
    %1283 = vmatprep.subr.mxu0 0.0
    %1284 = vmatpush1.msra.mxu0 0.0
    %1285 = vmatprep.subr.mxu0 0.0
    %1286 = vmatpush1.msra.mxu0 0.0
    %1287 = vmatprep.subr.mxu0 0.0
    %1288 = vmatpush1.msra.mxu0 0.0
    %1289 = vmatprep.subr.mxu0 0.0
    %1290 = vmatpush1.msra.mxu0 0.0
    %1291 = vmatprep.subr.mxu0 0.0
    %1292 = vmatpush1.msra.mxu0 0.0
    %1293 = vmatprep.subr.mxu0 0.0
    %1294 = vmatpush1.msra.mxu0 0.0
    %1295 = vmatprep.subr.mxu0 0.0
    %1296 = vmatpush1.msra.mxu0 0.0
    %1297 = vmatprep.subr.mxu0 0.0
    %1298 = vmatpush1.msra.mxu0 0.0
    %1299 = vmatprep.subr.mxu0 0.0
    %1300 = vmatpush1.msra.mxu0 0.0
    %1301 = vmatprep.subr.mxu0 0.0
    %1302 = vmatpush1.msra.mxu0 0.0
    %1303 = vmatprep.subr.mxu0 0.0
    %1304 = vmatpush1.msra.mxu0 0.0
    %1305 = vmatprep.subr.mxu0 0.0
    %1306 = vmatpush1.msra.mxu0 0.0
    %1307 = vmatprep.subr.mxu0 0.0
    %1308 = vmatpush1.msra.mxu0 0.0
    %1309 = vmatprep.subr.mxu0 0.0
    %1310 = vmatpush1.msra.mxu0 0.0
    %1311 = vmatprep.subr.mxu0 0.0
    %1312 = vmatpush1.msra.mxu0 0.0
    %1313 = vmatprep.subr.mxu0 0.0
    %1314 = vmatpush1.msra.mxu0 0.0
    %1315 = vmatprep.subr.mxu0 0.0
    %1316 = vmatpush1.msra.mxu0 0.0
    %1317 = vmatprep.subr.mxu0 0.0
    %1318 = vmatpush1.msra.mxu0 0.0
    %1319 = vmatprep.mubr.f32.mxu0 0.0
    %1320 = vmatmul.mubr.f32.gmra.mrb[0].mxu0 %v1253
    %v1321 = vpop.f32.mrb[0].mxu0
    %v1322 = vadd.f32 0.0, %v1321
    %v1323 = vpop.f32.mrb[0].mxu0
    %1324 = vdwg.mxu0
    %v1326 = vrot.slane %v1322, 6
    %v1328 = vadd.f32 %v1147, %v1326
    %v1329 = vxor.u32 %v1328, 2147483648
    %v1330 = vmul.f32 %v1329, 1.442695
    %v1331 = vpow.pop %v1330
    %v1332 = vadd.f32 %v1331, 1.0
    %v1333 = vrcp.pop %v1332
    %v1334 = vmul.f32 1.0, %v1333
    %v1335 = vtanh.pop %v1328
    %v1337 = vrot.slane %v1243, 6
    %v1339 = vmul.f32 %v1334, %v1337
    %1341 = vrot.lane.b32.xlu0 %v1335, 64
    %v1342 = vpop.permute.xlu0 %1341
    %v1344 = vmul.f32 %v1334, %v1342
    %1346 = vrot.lane.b32.xlu0 %v1344, 32
    %v1347 = vpop.permute.xlu0 %1346
    %v1349 = vadd.f32 %v1339, %v1347
    %v1350 = vtanh.pop %v1349
    %1352 = vrot.lane.b32.xlu0 %v1350, 64
    %v1353 = vpop.permute.xlu0 %1352
    %v1355 = vmul.f32 %v1334, %v1353
    %v1357 = vrot.slane %v1355, 2
    %1358 = vrot.lane.b32.xlu0 %v1357, 32
    %v1359 = vpop.permute.xlu0 %1358
    %v1360 = vsel %vm203, %v1359, 0
    %1362 = vmatprep.subr.mxu0 0.0
    %1363 = vmatpush1.msra.mxu0 %v1060
    %1364 = vmatprep.subr.mxu0 0.0
    %1365 = vmatpush1.msra.mxu0 %v1061
    %1366 = vmatprep.subr.mxu0 0.0
    %1367 = vmatpush1.msra.mxu0 %v1062
    %1368 = vmatprep.subr.mxu0 0.0
    %1369 = vmatpush1.msra.mxu0 %v1063
    %1370 = vmatprep.subr.mxu0 0.0
    %1371 = vmatpush1.msra.mxu0 0.0
    %1372 = vmatprep.subr.mxu0 0.0
    %1373 = vmatpush1.msra.mxu0 0.0
    %1374 = vmatprep.subr.mxu0 0.0
    %1375 = vmatpush1.msra.mxu0 0.0
    %1376 = vmatprep.subr.mxu0 0.0
    %1377 = vmatpush1.msra.mxu0 0.0
    %1378 = vmatprep.subr.mxu0 0.0
    %1379 = vmatpush1.msra.mxu0 0.0
    %1380 = vmatprep.subr.mxu0 0.0
    %1381 = vmatpush1.msra.mxu0 0.0
    %1382 = vmatprep.subr.mxu0 0.0
    %1383 = vmatpush1.msra.mxu0 0.0
    %1384 = vmatprep.subr.mxu0 0.0
    %1385 = vmatpush1.msra.mxu0 0.0
    %1386 = vmatprep.subr.mxu0 0.0
    %1387 = vmatpush1.msra.mxu0 0.0
    %1388 = vmatprep.subr.mxu0 0.0
    %1389 = vmatpush1.msra.mxu0 0.0
    %1390 = vmatprep.subr.mxu0 0.0
    %1391 = vmatpush1.msra.mxu0 0.0
    %1392 = vmatprep.subr.mxu0 0.0
    %1393 = vmatpush1.msra.mxu0 0.0
    %1394 = vmatprep.subr.mxu0 0.0
    %1395 = vmatpush1.msra.mxu0 0.0
    %1396 = vmatprep.subr.mxu0 0.0
    %1397 = vmatpush1.msra.mxu0 0.0
    %1398 = vmatprep.subr.mxu0 0.0
    %1399 = vmatpush1.msra.mxu0 0.0
    %1400 = vmatprep.subr.mxu0 0.0
    %1401 = vmatpush1.msra.mxu0 0.0
    %1402 = vmatprep.subr.mxu0 0.0
    %1403 = vmatpush1.msra.mxu0 0.0
    %1404 = vmatprep.subr.mxu0 0.0
    %1405 = vmatpush1.msra.mxu0 0.0
    %1406 = vmatprep.subr.mxu0 0.0
    %1407 = vmatpush1.msra.mxu0 0.0
    %1408 = vmatprep.subr.mxu0 0.0
    %1409 = vmatpush1.msra.mxu0 0.0
    %1410 = vmatprep.subr.mxu0 0.0
    %1411 = vmatpush1.msra.mxu0 0.0
    %1412 = vmatprep.subr.mxu0 0.0
    %1413 = vmatpush1.msra.mxu0 0.0
    %1414 = vmatprep.subr.mxu0 0.0
    %1415 = vmatpush1.msra.mxu0 0.0
    %1416 = vmatprep.subr.mxu0 0.0
    %1417 = vmatpush1.msra.mxu0 0.0
    %1418 = vmatprep.subr.mxu0 0.0
    %1419 = vmatpush1.msra.mxu0 0.0
    %1420 = vmatprep.subr.mxu0 0.0
    %1421 = vmatpush1.msra.mxu0 0.0
    %1422 = vmatprep.subr.mxu0 0.0
    %1423 = vmatpush1.msra.mxu0 0.0
    %1424 = vmatprep.subr.mxu0 0.0
    %1425 = vmatpush1.msra.mxu0 0.0
    %1426 = vmatprep.mubr.f32.mxu0 0.0
    %1427 = vmatmul.mubr.f32.gmra.mrb[0].mxu0 %v1360
    %v1428 = vpop.f32.mrb[0].mxu0
    %v1429 = vadd.f32 0.0, %v1428
    %v1430 = vpop.f32.mrb[0].mxu0
    %1431 = vdwg.mxu0
    %v1433 = vrot.slane %v1429, 4
    %v1435 = vadd.f32 %v1147, %v1433
    %v1436 = vxor.u32 %v1435, 2147483648
    %v1437 = vmul.f32 %v1436, 1.442695
    %v1438 = vpow.pop %v1437
    %v1439 = vadd.f32 %v1438, 1.0
    %v1440 = vrcp.pop %v1439
    %v1441 = vmul.f32 1.0, %v1440
    %v1442 = vtanh.pop %v1435
    %v1444 = vrot.slane %v1349, 6
    %v1446 = vmul.f32 %v1441, %v1444
    %1448 = vrot.lane.b32.xlu0 %v1442, 64
    %v1449 = vpop.permute.xlu0 %1448
    %v1451 = vmul.f32 %v1441, %v1449
    %1453 = vrot.lane.b32.xlu0 %v1451, 32
    %v1454 = vpop.permute.xlu0 %1453
    %v1456 = vadd.f32 %v1446, %v1454
    %v1457 = vtanh.pop %v1456
    %1459 = vrot.lane.b32.xlu0 %v1457, 64
    %v1460 = vpop.permute.xlu0 %1459
    %v1462 = vmul.f32 %v1441, %v1460
    %v1464 = vrot.slane %v1462, 4
    %1465 = vrot.lane.b32.xlu0 %v1464, 32
    %v1466 = vpop.permute.xlu0 %1465
    %v1467 = vsel %vm203, %v1466, 0
    %1469 = vmatprep.subr.mxu0 0.0
    %1470 = vmatpush1.msra.mxu0 %v1060
    %1471 = vmatprep.subr.mxu0 0.0
    %1472 = vmatpush1.msra.mxu0 %v1061
    %1473 = vmatprep.subr.mxu0 0.0
    %1474 = vmatpush1.msra.mxu0 %v1062
    %1475 = vmatprep.subr.mxu0 0.0
    %1476 = vmatpush1.msra.mxu0 %v1063
    %1477 = vmatprep.subr.mxu0 0.0
    %1478 = vmatpush1.msra.mxu0 0.0
    %1479 = vmatprep.subr.mxu0 0.0
    %1480 = vmatpush1.msra.mxu0 0.0
    %1481 = vmatprep.subr.mxu0 0.0
    %1482 = vmatpush1.msra.mxu0 0.0
    %1483 = vmatprep.subr.mxu0 0.0
    %1484 = vmatpush1.msra.mxu0 0.0
    %1485 = vmatprep.subr.mxu0 0.0
    %1486 = vmatpush1.msra.mxu0 0.0
    %1487 = vmatprep.subr.mxu0 0.0
    %1488 = vmatpush1.msra.mxu0 0.0
    %1489 = vmatprep.subr.mxu0 0.0
    %1490 = vmatpush1.msra.mxu0 0.0
    %1491 = vmatprep.subr.mxu0 0.0
    %1492 = vmatpush1.msra.mxu0 0.0
    %1493 = vmatprep.subr.mxu0 0.0
    %1494 = vmatpush1.msra.mxu0 0.0
    %1495 = vmatprep.subr.mxu0 0.0
    %1496 = vmatpush1.msra.mxu0 0.0
    %1497 = vmatprep.subr.mxu0 0.0
    %1498 = vmatpush1.msra.mxu0 0.0
    %1499 = vmatprep.subr.mxu0 0.0
    %1500 = vmatpush1.msra.mxu0 0.0
    %1501 = vmatprep.subr.mxu0 0.0
    %1502 = vmatpush1.msra.mxu0 0.0
    %1503 = vmatprep.subr.mxu0 0.0
    %1504 = vmatpush1.msra.mxu0 0.0
    %1505 = vmatprep.subr.mxu0 0.0
    %1506 = vmatpush1.msra.mxu0 0.0
    %1507 = vmatprep.subr.mxu0 0.0
    %1508 = vmatpush1.msra.mxu0 0.0
    %1509 = vmatprep.subr.mxu0 0.0
    %1510 = vmatpush1.msra.mxu0 0.0
    %1511 = vmatprep.subr.mxu0 0.0
    %1512 = vmatpush1.msra.mxu0 0.0
    %1513 = vmatprep.subr.mxu0 0.0
    %1514 = vmatpush1.msra.mxu0 0.0
    %1515 = vmatprep.subr.mxu0 0.0
    %1516 = vmatpush1.msra.mxu0 0.0
    %1517 = vmatprep.subr.mxu0 0.0
    %1518 = vmatpush1.msra.mxu0 0.0
    %1519 = vmatprep.subr.mxu0 0.0
    %1520 = vmatpush1.msra.mxu0 0.0
    %1521 = vmatprep.subr.mxu0 0.0
    %1522 = vmatpush1.msra.mxu0 0.0
    %1523 = vmatprep.subr.mxu0 0.0
    %1524 = vmatpush1.msra.mxu0 0.0
    %1525 = vmatprep.subr.mxu0 0.0
    %1526 = vmatpush1.msra.mxu0 0.0
    %1527 = vmatprep.subr.mxu0 0.0
    %1528 = vmatpush1.msra.mxu0 0.0
    %1529 = vmatprep.subr.mxu0 0.0
    %1530 = vmatpush1.msra.mxu0 0.0
    %1531 = vmatprep.subr.mxu0 0.0
    %1532 = vmatpush1.msra.mxu0 0.0
    %1533 = vmatprep.mubr.f32.mxu0 0.0
    %1534 = vmatmul.mubr.f32.gmra.mrb[0].mxu0 %v1467
    %v1535 = vpop.f32.mrb[0].mxu0
    %v1536 = vadd.f32 0.0, %v1535
    %v1537 = vpop.f32.mrb[0].mxu0
    %1538 = vdwg.mxu0
    %v1540 = vrot.slane %v1536, 2
    %v1542 = vadd.f32 %v1147, %v1540
    %v1543 = vxor.u32 %v1542, 2147483648
    %v1544 = vmul.f32 %v1543, 1.442695
    %v1545 = vpow.pop %v1544
    %v1546 = vadd.f32 %v1545, 1.0
    %v1547 = vrcp.pop %v1546
    %v1548 = vmul.f32 1.0, %v1547
    %v1549 = vtanh.pop %v1542
    %v1551 = vrot.slane %v1456, 6
    %v1553 = vmul.f32 %v1548, %v1551
    %1555 = vrot.lane.b32.xlu0 %v1549, 64
    %v1556 = vpop.permute.xlu0 %1555
    %v1558 = vmul.f32 %v1548, %v1556
    %1560 = vrot.lane.b32.xlu0 %v1558, 32
    %v1561 = vpop.permute.xlu0 %1560
    %v1563 = vadd.f32 %v1553, %v1561
    %v1564 = vtanh.pop %v1563
    %1566 = vrot.lane.b32.xlu0 %v1564, 64
    %v1567 = vpop.permute.xlu0 %1566
    %v1569 = vmul.f32 %v1548, %v1567
    %v1571 = vrot.slane %v1569, 6
    %1572 = vrot.lane.b32.xlu0 %v1571, 32
    %v1573 = vpop.permute.xlu0 %1572
    %v1574 = vsel %vm203, %v1573, 0
    %1576 = vmatprep.subr.mxu0 0.0
    %1577 = vmatpush1.msra.mxu0 %v1060
    %1578 = vmatprep.subr.mxu0 0.0
    %1579 = vmatpush1.msra.mxu0 %v1061
    %1580 = vmatprep.subr.mxu0 0.0
    %1581 = vmatpush1.msra.mxu0 %v1062
    %1582 = vmatprep.subr.mxu0 0.0
    %1583 = vmatpush1.msra.mxu0 %v1063
    %1584 = vmatprep.subr.mxu0 0.0
    %1585 = vmatpush1.msra.mxu0 0.0
    %1586 = vmatprep.subr.mxu0 0.0
    %1587 = vmatpush1.msra.mxu0 0.0
    %1588 = vmatprep.subr.mxu0 0.0
    %1589 = vmatpush1.msra.mxu0 0.0
    %1590 = vmatprep.subr.mxu0 0.0
    %1591 = vmatpush1.msra.mxu0 0.0
    %1592 = vmatprep.subr.mxu0 0.0
    %1593 = vmatpush1.msra.mxu0 0.0
    %1594 = vmatprep.subr.mxu0 0.0
    %1595 = vmatpush1.msra.mxu0 0.0
    %1596 = vmatprep.subr.mxu0 0.0
    %1597 = vmatpush1.msra.mxu0 0.0
    %1598 = vmatprep.subr.mxu0 0.0
    %1599 = vmatpush1.msra.mxu0 0.0
    %1600 = vmatprep.subr.mxu0 0.0
    %1601 = vmatpush1.msra.mxu0 0.0
    %1602 = vmatprep.subr.mxu0 0.0
    %1603 = vmatpush1.msra.mxu0 0.0
    %1604 = vmatprep.subr.mxu0 0.0
    %1605 = vmatpush1.msra.mxu0 0.0
    %1606 = vmatprep.subr.mxu0 0.0
    %1607 = vmatpush1.msra.mxu0 0.0
    %1608 = vmatprep.subr.mxu0 0.0
    %1609 = vmatpush1.msra.mxu0 0.0
    %1610 = vmatprep.subr.mxu0 0.0
    %1611 = vmatpush1.msra.mxu0 0.0
    %1612 = vmatprep.subr.mxu0 0.0
    %1613 = vmatpush1.msra.mxu0 0.0
    %1614 = vmatprep.subr.mxu0 0.0
    %1615 = vmatpush1.msra.mxu0 0.0
    %1616 = vmatprep.subr.mxu0 0.0
    %1617 = vmatpush1.msra.mxu0 0.0
    %1618 = vmatprep.subr.mxu0 0.0
    %1619 = vmatpush1.msra.mxu0 0.0
    %1620 = vmatprep.subr.mxu0 0.0
    %1621 = vmatpush1.msra.mxu0 0.0
    %1622 = vmatprep.subr.mxu0 0.0
    %1623 = vmatpush1.msra.mxu0 0.0
    %1624 = vmatprep.subr.mxu0 0.0
    %1625 = vmatpush1.msra.mxu0 0.0
    %1626 = vmatprep.subr.mxu0 0.0
    %1627 = vmatpush1.msra.mxu0 0.0
    %1628 = vmatprep.subr.mxu0 0.0
    %1629 = vmatpush1.msra.mxu0 0.0
    %1630 = vmatprep.subr.mxu0 0.0
    %1631 = vmatpush1.msra.mxu0 0.0
    %1632 = vmatprep.subr.mxu0 0.0
    %1633 = vmatpush1.msra.mxu0 0.0
    %1634 = vmatprep.subr.mxu0 0.0
    %1635 = vmatpush1.msra.mxu0 0.0
    %1636 = vmatprep.subr.mxu0 0.0
    %1637 = vmatpush1.msra.mxu0 0.0
    %1638 = vmatprep.subr.mxu0 0.0
    %1639 = vmatpush1.msra.mxu0 0.0
    %1640 = vmatprep.mubr.f32.mxu0 0.0
    %1641 = vmatmul.mubr.f32.gmra.mrb[0].mxu0 %v1574
    %v1642 = vpop.f32.mrb[0].mxu0
    %v1643 = vadd.f32 0.0, %v1642
    %v1644 = vpop.f32.mrb[0].mxu0
    %1645 = vdwg.mxu0
    %v1646 = vadd.f32 %v1152, %v1643
    %v1647 = vxor.u32 %v1646, 2147483648
    %v1648 = vmul.f32 %v1647, 1.442695
    %v1649 = vpow.pop %v1648
    %v1650 = vadd.f32 %v1649, 1.0
    %v1651 = vrcp.pop %v1650
    %v1652 = vmul.f32 1.0, %v1651
    %v1653 = vtanh.pop %v1646
    %v1655 = vrot.slane %v1563, 6
    %v1657 = vmul.f32 %v1652, %v1655
    %1659 = vrot.lane.b32.xlu0 %v1653, 64
    %v1660 = vpop.permute.xlu0 %1659
    %v1662 = vmul.f32 %v1652, %v1660
    %1664 = vrot.lane.b32.xlu0 %v1662, 32
    %v1665 = vpop.permute.xlu0 %1664
    %v1667 = vadd.f32 %v1657, %v1665
    %v1668 = vtanh.pop %v1667
    %1670 = vrot.lane.b32.xlu0 %v1668, 64
    %v1671 = vpop.permute.xlu0 %1670
    %v1673 = vmul.f32 %v1652, %v1671
    %1675 = vrot.lane.b32.xlu0 %v1673, 32
    %v1676 = vpop.permute.xlu0 %1675
    %v1677 = vsel %vm203, %v1676, 0
    %1679 = vmatprep.subr.mxu0 0.0
    %1680 = vmatpush1.msra.mxu0 %v1060
    %1681 = vmatprep.subr.mxu0 0.0
    %1682 = vmatpush1.msra.mxu0 %v1061
    %1683 = vmatprep.subr.mxu0 0.0
    %1684 = vmatpush1.msra.mxu0 %v1062
    %1685 = vmatprep.subr.mxu0 0.0
    %1686 = vmatpush1.msra.mxu0 %v1063
    %1687 = vmatprep.subr.mxu0 0.0
    %1688 = vmatpush1.msra.mxu0 0.0
    %1689 = vmatprep.subr.mxu0 0.0
    %1690 = vmatpush1.msra.mxu0 0.0
    %1691 = vmatprep.subr.mxu0 0.0
    %1692 = vmatpush1.msra.mxu0 0.0
    %1693 = vmatprep.subr.mxu0 0.0
    %1694 = vmatpush1.msra.mxu0 0.0
    %1695 = vmatprep.subr.mxu0 0.0
    %1696 = vmatpush1.msra.mxu0 0.0
    %1697 = vmatprep.subr.mxu0 0.0
    %1698 = vmatpush1.msra.mxu0 0.0
    %1699 = vmatprep.subr.mxu0 0.0
    %1700 = vmatpush1.msra.mxu0 0.0
    %1701 = vmatprep.subr.mxu0 0.0
    %1702 = vmatpush1.msra.mxu0 0.0
    %1703 = vmatprep.subr.mxu0 0.0
    %1704 = vmatpush1.msra.mxu0 0.0
    %1705 = vmatprep.subr.mxu0 0.0
    %1706 = vmatpush1.msra.mxu0 0.0
    %1707 = vmatprep.subr.mxu0 0.0
    %1708 = vmatpush1.msra.mxu0 0.0
    %1709 = vmatprep.subr.mxu0 0.0
    %1710 = vmatpush1.msra.mxu0 0.0
    %1711 = vmatprep.subr.mxu0 0.0
    %1712 = vmatpush1.msra.mxu0 0.0
    %1713 = vmatprep.subr.mxu0 0.0
    %1714 = vmatpush1.msra.mxu0 0.0
    %1715 = vmatprep.subr.mxu0 0.0
    %1716 = vmatpush1.msra.mxu0 0.0
    %1717 = vmatprep.subr.mxu0 0.0
    %1718 = vmatpush1.msra.mxu0 0.0
    %1719 = vmatprep.subr.mxu0 0.0
    %1720 = vmatpush1.msra.mxu0 0.0
    %1721 = vmatprep.subr.mxu0 0.0
    %1722 = vmatpush1.msra.mxu0 0.0
    %1723 = vmatprep.subr.mxu0 0.0
    %1724 = vmatpush1.msra.mxu0 0.0
    %1725 = vmatprep.subr.mxu0 0.0
    %1726 = vmatpush1.msra.mxu0 0.0
    %1727 = vmatprep.subr.mxu0 0.0
    %1728 = vmatpush1.msra.mxu0 0.0
    %1729 = vmatprep.subr.mxu0 0.0
    %1730 = vmatpush1.msra.mxu0 0.0
    %1731 = vmatprep.subr.mxu0 0.0
    %1732 = vmatpush1.msra.mxu0 0.0
    %1733 = vmatprep.subr.mxu0 0.0
    %1734 = vmatpush1.msra.mxu0 0.0
    %1735 = vmatprep.subr.mxu0 0.0
    %1736 = vmatpush1.msra.mxu0 0.0
    %1737 = vmatprep.subr.mxu0 0.0
    %1738 = vmatpush1.msra.mxu0 0.0
    %1739 = vmatprep.subr.mxu0 0.0
    %1740 = vmatpush1.msra.mxu0 0.0
    %1741 = vmatprep.subr.mxu0 0.0
    %1742 = vmatpush1.msra.mxu0 0.0
    %1743 = vmatprep.mubr.f32.mxu0 0.0
    %1744 = vmatmul.mubr.f32.gmra.mrb[0].mxu0 %v1677
    %v1745 = vpop.f32.mrb[0].mxu0
    %v1746 = vadd.f32 0.0, %v1745
    %v1747 = vpop.f32.mrb[0].mxu0
    %1748 = vdwg.mxu0
    %v1750 = vrot.slane %v1746, 6
    %v1752 = vadd.f32 %v1152, %v1750
    %v1753 = vxor.u32 %v1752, 2147483648
    %v1754 = vmul.f32 %v1753, 1.442695
    %v1755 = vpow.pop %v1754
    %v1756 = vadd.f32 %v1755, 1.0
    %v1757 = vrcp.pop %v1756
    %v1758 = vmul.f32 1.0, %v1757
    %v1759 = vtanh.pop %v1752
    %v1761 = vrot.slane %v1667, 6
    %v1763 = vmul.f32 %v1758, %v1761
    %1765 = vrot.lane.b32.xlu0 %v1759, 64
    %v1766 = vpop.permute.xlu0 %1765
    %v1768 = vmul.f32 %v1758, %v1766
    %1770 = vrot.lane.b32.xlu0 %v1768, 32
    %v1771 = vpop.permute.xlu0 %1770
    %v1773 = vadd.f32 %v1763, %v1771
    %v1774 = vtanh.pop %v1773
    %1776 = vrot.lane.b32.xlu0 %v1774, 64
    %v1777 = vpop.permute.xlu0 %1776
    %v1779 = vmul.f32 %v1758, %v1777
    %v1781 = vrot.slane %v1779, 2
    %1782 = vrot.lane.b32.xlu0 %v1781, 32
    %v1783 = vpop.permute.xlu0 %1782
    %v1784 = vsel %vm203, %v1783, 0
    %1786 = vmatprep.subr.mxu0 0.0
    %1787 = vmatpush1.msra.mxu0 %v1060
    %1788 = vmatprep.subr.mxu0 0.0
    %1789 = vmatpush1.msra.mxu0 %v1061
    %1790 = vmatprep.subr.mxu0 0.0
    %1791 = vmatpush1.msra.mxu0 %v1062
    %1792 = vmatprep.subr.mxu0 0.0
    %1793 = vmatpush1.msra.mxu0 %v1063
    %1794 = vmatprep.subr.mxu0 0.0
    %1795 = vmatpush1.msra.mxu0 0.0
    %1796 = vmatprep.subr.mxu0 0.0
    %1797 = vmatpush1.msra.mxu0 0.0
    %1798 = vmatprep.subr.mxu0 0.0
    %1799 = vmatpush1.msra.mxu0 0.0
    %1800 = vmatprep.subr.mxu0 0.0
    %1801 = vmatpush1.msra.mxu0 0.0
    %1802 = vmatprep.subr.mxu0 0.0
    %1803 = vmatpush1.msra.mxu0 0.0
    %1804 = vmatprep.subr.mxu0 0.0
    %1805 = vmatpush1.msra.mxu0 0.0
    %1806 = vmatprep.subr.mxu0 0.0
    %1807 = vmatpush1.msra.mxu0 0.0
    %1808 = vmatprep.subr.mxu0 0.0
    %1809 = vmatpush1.msra.mxu0 0.0
    %1810 = vmatprep.subr.mxu0 0.0
    %1811 = vmatpush1.msra.mxu0 0.0
    %1812 = vmatprep.subr.mxu0 0.0
    %1813 = vmatpush1.msra.mxu0 0.0
    %1814 = vmatprep.subr.mxu0 0.0
    %1815 = vmatpush1.msra.mxu0 0.0
    %1816 = vmatprep.subr.mxu0 0.0
    %1817 = vmatpush1.msra.mxu0 0.0
    %1818 = vmatprep.subr.mxu0 0.0
    %1819 = vmatpush1.msra.mxu0 0.0
    %1820 = vmatprep.subr.mxu0 0.0
    %1821 = vmatpush1.msra.mxu0 0.0
    %1822 = vmatprep.subr.mxu0 0.0
    %1823 = vmatpush1.msra.mxu0 0.0
    %1824 = vmatprep.subr.mxu0 0.0
    %1825 = vmatpush1.msra.mxu0 0.0
    %1826 = vmatprep.subr.mxu0 0.0
    %1827 = vmatpush1.msra.mxu0 0.0
    %1828 = vmatprep.subr.mxu0 0.0
    %1829 = vmatpush1.msra.mxu0 0.0
    %1830 = vmatprep.subr.mxu0 0.0
    %1831 = vmatpush1.msra.mxu0 0.0
    %1832 = vmatprep.subr.mxu0 0.0
    %1833 = vmatpush1.msra.mxu0 0.0
    %1834 = vmatprep.subr.mxu0 0.0
    %1835 = vmatpush1.msra.mxu0 0.0
    %1836 = vmatprep.subr.mxu0 0.0
    %1837 = vmatpush1.msra.mxu0 0.0
    %1838 = vmatprep.subr.mxu0 0.0
    %1839 = vmatpush1.msra.mxu0 0.0
    %1840 = vmatprep.subr.mxu0 0.0
    %1841 = vmatpush1.msra.mxu0 0.0
    %1842 = vmatprep.subr.mxu0 0.0
    %1843 = vmatpush1.msra.mxu0 0.0
    %1844 = vmatprep.subr.mxu0 0.0
    %1845 = vmatpush1.msra.mxu0 0.0
    %1846 = vmatprep.subr.mxu0 0.0
    %1847 = vmatpush1.msra.mxu0 0.0
    %1848 = vmatprep.subr.mxu0 0.0
    %1849 = vmatpush1.msra.mxu0 0.0
    %1850 = vmatprep.mubr.f32.mxu0 0.0
    %1851 = vmatmul.mubr.f32.gmra.mrb[0].mxu0 %v1784
    %v1852 = vpop.f32.mrb[0].mxu0
    %v1853 = vadd.f32 0.0, %v1852
    %v1854 = vpop.f32.mrb[0].mxu0
    %1855 = vdwg.mxu0
    %v1857 = vrot.slane %v1853, 4
    %v1859 = vadd.f32 %v1152, %v1857
    %v1860 = vxor.u32 %v1859, 2147483648
    %v1861 = vmul.f32 %v1860, 1.442695
    %v1862 = vpow.pop %v1861
    %v1863 = vadd.f32 %v1862, 1.0
    %v1864 = vrcp.pop %v1863
    %v1865 = vmul.f32 1.0, %v1864
    %v1866 = vtanh.pop %v1859
    %v1868 = vrot.slane %v1773, 6
    %v1870 = vmul.f32 %v1865, %v1868
    %1872 = vrot.lane.b32.xlu0 %v1866, 64
    %v1873 = vpop.permute.xlu0 %1872
    %v1875 = vmul.f32 %v1865, %v1873
    %1877 = vrot.lane.b32.xlu0 %v1875, 32
    %v1878 = vpop.permute.xlu0 %1877
    %v1880 = vadd.f32 %v1870, %v1878
    %v1881 = vtanh.pop %v1880
    %1883 = vrot.lane.b32.xlu0 %v1881, 64
    %v1884 = vpop.permute.xlu0 %1883
    %v1886 = vmul.f32 %v1865, %v1884
    %v1888 = vrot.slane %v1886, 4
    %1889 = vrot.lane.b32.xlu0 %v1888, 32
    %v1890 = vpop.permute.xlu0 %1889
    %v1891 = vsel %vm203, %v1890, 0
    %1893 = vmatprep.subr.mxu0 0.0
    %1894 = vmatpush1.msra.mxu0 %v1060
    %1895 = vmatprep.subr.mxu0 0.0
    %1896 = vmatpush1.msra.mxu0 %v1061
    %1897 = vmatprep.subr.mxu0 0.0
    %1898 = vmatpush1.msra.mxu0 %v1062
    %1899 = vmatprep.subr.mxu0 0.0
    %1900 = vmatpush1.msra.mxu0 %v1063
    %1901 = vmatprep.subr.mxu0 0.0
    %1902 = vmatpush1.msra.mxu0 0.0
    %1903 = vmatprep.subr.mxu0 0.0
    %1904 = vmatpush1.msra.mxu0 0.0
    %1905 = vmatprep.subr.mxu0 0.0
    %1906 = vmatpush1.msra.mxu0 0.0
    %1907 = vmatprep.subr.mxu0 0.0
    %1908 = vmatpush1.msra.mxu0 0.0
    %1909 = vmatprep.subr.mxu0 0.0
    %1910 = vmatpush1.msra.mxu0 0.0
    %1911 = vmatprep.subr.mxu0 0.0
    %1912 = vmatpush1.msra.mxu0 0.0
    %1913 = vmatprep.subr.mxu0 0.0
    %1914 = vmatpush1.msra.mxu0 0.0
    %1915 = vmatprep.subr.mxu0 0.0
    %1916 = vmatpush1.msra.mxu0 0.0
    %1917 = vmatprep.subr.mxu0 0.0
    %1918 = vmatpush1.msra.mxu0 0.0
    %1919 = vmatprep.subr.mxu0 0.0
    %1920 = vmatpush1.msra.mxu0 0.0
    %1921 = vmatprep.subr.mxu0 0.0
    %1922 = vmatpush1.msra.mxu0 0.0
    %1923 = vmatprep.subr.mxu0 0.0
    %1924 = vmatpush1.msra.mxu0 0.0
    %1925 = vmatprep.subr.mxu0 0.0
    %1926 = vmatpush1.msra.mxu0 0.0
    %1927 = vmatprep.subr.mxu0 0.0
    %1928 = vmatpush1.msra.mxu0 0.0
    %1929 = vmatprep.subr.mxu0 0.0
    %1930 = vmatpush1.msra.mxu0 0.0
    %1931 = vmatprep.subr.mxu0 0.0
    %1932 = vmatpush1.msra.mxu0 0.0
    %1933 = vmatprep.subr.mxu0 0.0
    %1934 = vmatpush1.msra.mxu0 0.0
    %1935 = vmatprep.subr.mxu0 0.0
    %1936 = vmatpush1.msra.mxu0 0.0
    %1937 = vmatprep.subr.mxu0 0.0
    %1938 = vmatpush1.msra.mxu0 0.0
    %1939 = vmatprep.subr.mxu0 0.0
    %1940 = vmatpush1.msra.mxu0 0.0
    %1941 = vmatprep.subr.mxu0 0.0
    %1942 = vmatpush1.msra.mxu0 0.0
    %1943 = vmatprep.subr.mxu0 0.0
    %1944 = vmatpush1.msra.mxu0 0.0
    %1945 = vmatprep.subr.mxu0 0.0
    %1946 = vmatpush1.msra.mxu0 0.0
    %1947 = vmatprep.subr.mxu0 0.0
    %1948 = vmatpush1.msra.mxu0 0.0
    %1949 = vmatprep.subr.mxu0 0.0
    %1950 = vmatpush1.msra.mxu0 0.0
    %1951 = vmatprep.subr.mxu0 0.0
    %1952 = vmatpush1.msra.mxu0 0.0
    %1953 = vmatprep.subr.mxu0 0.0
    %1954 = vmatpush1.msra.mxu0 0.0
    %1955 = vmatprep.subr.mxu0 0.0
    %1956 = vmatpush1.msra.mxu0 0.0
    %1957 = vmatprep.mubr.f32.mxu0 0.0
    %1958 = vmatmul.mubr.f32.gmra.mrb[0].mxu0 %v1891
    %v1959 = vpop.f32.mrb[0].mxu0
    %v1960 = vadd.f32 0.0, %v1959
    %v1961 = vpop.f32.mrb[0].mxu0
    %1962 = vdwg.mxu0
    %v1964 = vrot.slane %v1960, 2
    %v1966 = vadd.f32 %v1152, %v1964
    %v1967 = vxor.u32 %v1966, 2147483648
    %v1968 = vmul.f32 %v1967, 1.442695
    %v1969 = vpow.pop %v1968
    %v1970 = vadd.f32 %v1969, 1.0
    %v1971 = vrcp.pop %v1970
    %v1972 = vmul.f32 1.0, %v1971
    %v1973 = vtanh.pop %v1966
    %v1975 = vrot.slane %v1880, 6
    %v1977 = vmul.f32 %v1972, %v1975
    %1979 = vrot.lane.b32.xlu0 %v1973, 64
    %v1980 = vpop.permute.xlu0 %1979
    %v1982 = vmul.f32 %v1972, %v1980
    %1984 = vrot.lane.b32.xlu0 %v1982, 32
    %v1985 = vpop.permute.xlu0 %1984
    %v1987 = vadd.f32 %v1977, %v1985
    %v1988 = vtanh.pop %v1987
    %1990 = vrot.lane.b32.xlu0 %v1988, 64
    %v1991 = vpop.permute.xlu0 %1990
    %v1993 = vmul.f32 %v1972, %v1991
    %v1994 = vld [vmem:[#allocation8] sm:$0xff]
    %v1995 = vld [vmem:[#allocation8 + $0x8] sm:$0xff]
    %v1996 = vld [vmem:[#allocation8 + $0x10] sm:$0xff]
    %v1997 = vld [vmem:[#allocation8 + $0x18] sm:$0xff]
    %v1998 = vld [vmem:[%s8] sm:$0x1]
    %v2000 = vlaneseq
    %v2001 = vshrl.u32 %v2000, 7
    %v2002 = vsub.s32 0, %v2001
    %v2003 = vrot.slane %v1998, %v2002
    %v2006 = vrot.slane %v1993, 6
    %2007 = vrot.lane.b32.xlu0 %v2006, 32
    %v2008 = vpop.permute.xlu0 %2007
    %v2009 = vsel %vm203, %v2008, 0
    %2011 = vmatprep.subr.mxu0 0.0
    %2012 = vmatpush1.msra.mxu0 %v1994
    %2013 = vmatprep.subr.mxu0 0.0
    %2014 = vmatpush1.msra.mxu0 %v1995
    %2015 = vmatprep.subr.mxu0 0.0
    %2016 = vmatpush1.msra.mxu0 %v1996
    %2017 = vmatprep.subr.mxu0 0.0
    %2018 = vmatpush1.msra.mxu0 %v1997
    %2019 = vmatprep.subr.mxu0 0.0
    %2020 = vmatpush1.msra.mxu0 0.0
    %2021 = vmatprep.subr.mxu0 0.0
    %2022 = vmatpush1.msra.mxu0 0.0
    %2023 = vmatprep.subr.mxu0 0.0
    %2024 = vmatpush1.msra.mxu0 0.0
    %2025 = vmatprep.subr.mxu0 0.0
    %2026 = vmatpush1.msra.mxu0 0.0
    %2027 = vmatprep.subr.mxu0 0.0
    %2028 = vmatpush1.msra.mxu0 0.0
    %2029 = vmatprep.subr.mxu0 0.0
    %2030 = vmatpush1.msra.mxu0 0.0
    %2031 = vmatprep.subr.mxu0 0.0
    %2032 = vmatpush1.msra.mxu0 0.0
    %2033 = vmatprep.subr.mxu0 0.0
    %2034 = vmatpush1.msra.mxu0 0.0
    %2035 = vmatprep.subr.mxu0 0.0
    %2036 = vmatpush1.msra.mxu0 0.0
    %2037 = vmatprep.subr.mxu0 0.0
    %2038 = vmatpush1.msra.mxu0 0.0
    %2039 = vmatprep.subr.mxu0 0.0
    %2040 = vmatpush1.msra.mxu0 0.0
    %2041 = vmatprep.subr.mxu0 0.0
    %2042 = vmatpush1.msra.mxu0 0.0
    %2043 = vmatprep.subr.mxu0 0.0
    %2044 = vmatpush1.msra.mxu0 0.0
    %2045 = vmatprep.subr.mxu0 0.0
    %2046 = vmatpush1.msra.mxu0 0.0
    %2047 = vmatprep.subr.mxu0 0.0
    %2048 = vmatpush1.msra.mxu0 0.0
    %2049 = vmatprep.subr.mxu0 0.0
    %2050 = vmatpush1.msra.mxu0 0.0
    %2051 = vmatprep.subr.mxu0 0.0
    %2052 = vmatpush1.msra.mxu0 0.0
    %2053 = vmatprep.subr.mxu0 0.0
    %2054 = vmatpush1.msra.mxu0 0.0
    %2055 = vmatprep.subr.mxu0 0.0
    %2056 = vmatpush1.msra.mxu0 0.0
    %2057 = vmatprep.subr.mxu0 0.0
    %2058 = vmatpush1.msra.mxu0 0.0
    %2059 = vmatprep.subr.mxu0 0.0
    %2060 = vmatpush1.msra.mxu0 0.0
    %2061 = vmatprep.subr.mxu0 0.0
    %2062 = vmatpush1.msra.mxu0 0.0
    %2063 = vmatprep.subr.mxu0 0.0
    %2064 = vmatpush1.msra.mxu0 0.0
    %2065 = vmatprep.subr.mxu0 0.0
    %2066 = vmatpush1.msra.mxu0 0.0
    %2067 = vmatprep.subr.mxu0 0.0
    %2068 = vmatpush1.msra.mxu0 0.0
    %2069 = vmatprep.subr.mxu0 0.0
    %2070 = vmatpush1.msra.mxu0 0.0
    %2071 = vmatprep.subr.mxu0 0.0
    %2072 = vmatpush1.msra.mxu0 0.0
    %2073 = vmatprep.subr.mxu0 0.0
    %2074 = vmatpush1.msra.mxu0 0.0
    %2075 = vmatprep.mubr.f32.mxu0 0.0
    %2076 = vmatmul.mubr.f32.gmra.mrb[0].mxu0 %v2009
    %v2077 = vpop.f32.mrb[0].mxu0
    %v2078 = vadd.f32 %v2003, %v2077
    %v2079 = vpop.f32.mrb[0].mxu0
    %2080 = vdwg.mxu0
    %v2081 = vmax.f32 %v2078, 0.0
    %v2082 = vld [vmem:[%s9] sm:$0xff]
    %v2083 = vld [vmem:[%s9 + $0x8] sm:$0xff]
    %v2084 = vld [vmem:[%s9 + $0x10] sm:$0xff]
    %v2085 = vld [vmem:[%s9 + $0x18] sm:$0xff]
    %v2086 = vld [vmem:[%s10] sm:$0x1]
    %v2088 = vlaneseq
    %v2089 = vshrl.u32 %v2088, 7
    %v2090 = vsub.s32 0, %v2089
    %v2091 = vrot.slane %v2086, %v2090
    %v2094 = vsel %vm203, %v2081, 0
    %2096 = vmatprep.subr.mxu0 0.0
    %2097 = vmatpush1.msra.mxu0 %v2082
    %2098 = vmatprep.subr.mxu0 0.0
    %2099 = vmatpush1.msra.mxu0 %v2083
    %2100 = vmatprep.subr.mxu0 0.0
    %2101 = vmatpush1.msra.mxu0 %v2084
    %2102 = vmatprep.subr.mxu0 0.0
    %2103 = vmatpush1.msra.mxu0 %v2085
    %2104 = vmatprep.subr.mxu0 0.0
    %2105 = vmatpush1.msra.mxu0 0.0
    %2106 = vmatprep.subr.mxu0 0.0
    %2107 = vmatpush1.msra.mxu0 0.0
    %2108 = vmatprep.subr.mxu0 0.0
    %2109 = vmatpush1.msra.mxu0 0.0
    %2110 = vmatprep.subr.mxu0 0.0
    %2111 = vmatpush1.msra.mxu0 0.0
    %2112 = vmatprep.subr.mxu0 0.0
    %2113 = vmatpush1.msra.mxu0 0.0
    %2114 = vmatprep.subr.mxu0 0.0
    %2115 = vmatpush1.msra.mxu0 0.0
    %2116 = vmatprep.subr.mxu0 0.0
    %2117 = vmatpush1.msra.mxu0 0.0
    %2118 = vmatprep.subr.mxu0 0.0
    %2119 = vmatpush1.msra.mxu0 0.0
    %2120 = vmatprep.subr.mxu0 0.0
    %2121 = vmatpush1.msra.mxu0 0.0
    %2122 = vmatprep.subr.mxu0 0.0
    %2123 = vmatpush1.msra.mxu0 0.0
    %2124 = vmatprep.subr.mxu0 0.0
    %2125 = vmatpush1.msra.mxu0 0.0
    %2126 = vmatprep.subr.mxu0 0.0
    %2127 = vmatpush1.msra.mxu0 0.0
    %2128 = vmatprep.subr.mxu0 0.0
    %2129 = vmatpush1.msra.mxu0 0.0
    %2130 = vmatprep.subr.mxu0 0.0
    %2131 = vmatpush1.msra.mxu0 0.0
    %2132 = vmatprep.subr.mxu0 0.0
    %2133 = vmatpush1.msra.mxu0 0.0
    %2134 = vmatprep.subr.mxu0 0.0
    %2135 = vmatpush1.msra.mxu0 0.0
    %2136 = vmatprep.subr.mxu0 0.0
    %2137 = vmatpush1.msra.mxu0 0.0
    %2138 = vmatprep.subr.mxu0 0.0
    %2139 = vmatpush1.msra.mxu0 0.0
    %2140 = vmatprep.subr.mxu0 0.0
    %2141 = vmatpush1.msra.mxu0 0.0
    %2142 = vmatprep.subr.mxu0 0.0
    %2143 = vmatpush1.msra.mxu0 0.0
    %2144 = vmatprep.subr.mxu0 0.0
    %2145 = vmatpush1.msra.mxu0 0.0
    %2146 = vmatprep.subr.mxu0 0.0
    %2147 = vmatpush1.msra.mxu0 0.0
    %2148 = vmatprep.subr.mxu0 0.0
    %2149 = vmatpush1.msra.mxu0 0.0
    %2150 = vmatprep.subr.mxu0 0.0
    %2151 = vmatpush1.msra.mxu0 0.0
    %2152 = vmatprep.subr.mxu0 0.0
    %2153 = vmatpush1.msra.mxu0 0.0
    %2154 = vmatprep.subr.mxu0 0.0
    %2155 = vmatpush1.msra.mxu0 0.0
    %2156 = vmatprep.subr.mxu0 0.0
    %2157 = vmatpush1.msra.mxu0 0.0
    %2158 = vmatprep.subr.mxu0 0.0
    %2159 = vmatpush1.msra.mxu0 0.0
    %2160 = vmatprep.mubr.f32.mxu0 0.0
    %2161 = vmatmul.mubr.f32.gmra.mrb[0].mxu0 %v2094
    %v2162 = vpop.f32.mrb[0].mxu0
    %v2163 = vadd.f32 %v2091, %v2162
    %v2164 = vpop.f32.mrb[0].mxu0
    %2165 = vdwg.mxu0
    %vm2166 = vcmask 123904
    %2167 = vst.msk [vmem:[#allocation10] sm:$0x3] %vm2166, %v2163
    // Predicated region
    $region62: #{tpu_custom_call.1} parent=1 // pred_check
      _
    $region63: #{tpu_custom_call.1} parent=1 // pred_check_branch
      %2169 = sbr.rel (0) target = $region65
    $region64: #{tpu_custom_call.1} parent=1 // pred_region
      %s2171 = ssub.s32 32, 32
      %2172 = vsyncadd [#allocation4], %s2171
      %s2174 = sshll.u32 [#allocation10], 4
      %s2175 = int_to_ptr.vmem [resolvable:$true] %s2174
      %2177 = dma.vmem_to_hbm [thread:$0]  %s2175, 32, %s11, [#allocation4]
    $region65: #{tpu_custom_call.1} parent=1 // pred_fallthru
      _
    // Predicated region
    $region66: #{tpu_custom_call.1} parent=1 // pred_check
      _
    $region67: #{tpu_custom_call.1} parent=1 // pred_check_branch
      %2179 = sbr.rel (0) target = $region69
    $region68: #{tpu_custom_call.1} parent=1 // pred_region
      %2180 = dma.done [#allocation4], 32
    $region69: #{tpu_custom_call.1} parent=1 // pred_fallthru
      _
    %2181 = vsyncpa [#allocation3], 1
    %2182 = vsyncpa [#allocation6], 1
    %2183 = vsyncpa [#allocation9], 1
    %2184 = vsyncpa [#allocation4], 1

</llo_original>
